<compile_context>
chip_gen: v7x
topology: tpu7x:2x2x1
jax: 0.10.0
libtpu: 0.0.40
codegen_flags: <defaults>
</compile_context>

<pallas_src>
import functools
import math

import jax
import jax.numpy as jnp
from jax.experimental import pallas as pl
from jax.experimental.pallas import tpu as pltpu

T_SEQ = 5            # classify head expects Flatten of 16 * 5 features
D_IN = 15
HIDDENS = (64, 32, 16)
FC_PAD = 128         # lane padding for the MLP head outputs


# --------------------------------------------------------------------------
# Fused kernel: 3 LSTM layers + inter-layer Tanh + Flatten + Linear/ReLU/Linear
# --------------------------------------------------------------------------
def _fused_lstm_kernel(x_ref,
                       wih1_ref, whh1_ref, b1_ref,
                       wih2_ref, whh2_ref, b2_ref,
                       wih3_ref, whh3_ref, b3_ref,
                       wfc1_ref, bfc1_ref, wfc2_ref, bfc2_ref,
                       out_ref,
                       act1_ref, act2_ref,
                       *, seq_len, hiddens):
    f32, bf16 = jnp.float32, jnp.bfloat16
    T = seq_len
    B = out_ref.shape[0]                      # batch tile (multiple of 8)
    H1, H2, H3 = hiddens

    def sigmoid(z):
        # One EUP tanh per call instead of exp + reciprocal.
        return 0.5 * jnp.tanh(0.5 * z) + 0.5

    def lstm_layer(x_all, H, wih_ref_, whh_ref_, b_ref_, emit):
        """x_all: (T*B, K) f32, time-major.  Gate columns packed to 4*H,
        gate order [i, f, o, g].  Calls emit(t, h_t) for every step."""
        whh = whh_ref_[...]                                       # (H, 4H) bf16
        # One batched input projection for ALL timesteps (off the h-chain);
        # bias added once here, not per-step.
        xg_all = jnp.dot(x_all.astype(bf16), wih_ref_[...],
                         preferred_element_type=f32) + b_ref_[...]  # (T*B, 4H)
        h = jnp.zeros((B, H), f32)
        c = jnp.zeros((B, H), f32)
        for t in range(T):                       # fully unrolled (T static)
            gates = xg_all[t * B:(t + 1) * B, :] + jnp.dot(
                h.astype(bf16), whh, preferred_element_type=f32)  # (B, 4H)
            sg = sigmoid(gates[:, :3 * H])       # contiguous sigmoid slab
            i_g = sg[:, 0 * H:1 * H]
            f_g = sg[:, 1 * H:2 * H]
            o_g = sg[:, 2 * H:3 * H]
            g_g = jnp.tanh(gates[:, 3 * H:4 * H])
            c = f_g * c + i_g * g_g
            h = o_g * jnp.tanh(c)
            emit(t, h)

    # ---- layer 1 (+ inter-layer Tanh) -> VMEM scratch (time-major rows) ----
    def emit1(t, h):
        act1_ref[t * B:(t + 1) * B, :] = jnp.tanh(h)
    lstm_layer(x_ref[...], H1, wih1_ref, whh1_ref, b1_ref, emit1)

    # ---- layer 2 (+ inter-layer Tanh) -> VMEM scratch ----------------------
    def emit2(t, h):
        act2_ref[t * B:(t + 1) * B, :] = jnp.tanh(h)
    lstm_layer(act1_ref[...], H2, wih2_ref, whh2_ref, b2_ref, emit2)

    # ---- layer 3 (no Tanh): keep tiny per-step outputs as values -----------
    ys3 = [None] * T

    def emit3(t, h):
        ys3[t] = h
    lstm_layer(act2_ref[...], H3, wih3_ref, whh3_ref, b3_ref, emit3)

    # ---- Flatten + fc1 (tree-sum of independent partial dots) + ReLU + fc2 -
    # Flatten order matches PyTorch: feature (t, j) -> row t*H3 + j of wfc1.
    wfc1 = wfc1_ref[...]                                         # (T*H3, 128) bf16
    parts = [jnp.dot(ys3[t].astype(bf16), wfc1[t * H3:(t + 1) * H3, :],
                     preferred_element_type=f32) for t in range(T)]

    def tree_sum(vals):
        while len(vals) > 1:
            nxt = [vals[i] + vals[i + 1] for i in range(0, len(vals) - 1, 2)]
            if len(vals) % 2:
                nxt.append(vals[-1])
            vals = nxt
        return vals[0]

    fc1 = jnp.maximum(tree_sum(parts) + bfc1_ref[...], 0.0)      # (B, 128)
    out = jnp.dot(fc1.astype(bf16), wfc2_ref[...],
                  preferred_element_type=f32) + bfc2_ref[...]    # (B, 128), lane 0 live
    out_ref[...] = out.astype(out_ref.dtype)                     # lane-dense store


# --------------------------------------------------------------------------
# Parameter init (PyTorch-style U(-1/sqrt(fan), 1/sqrt(fan))), packed layout.
# --------------------------------------------------------------------------
def _init_lstm_params(key, d_in, hidden):
    """Gate columns packed to exactly 4*hidden lanes, gate order [i, f, o, g].
    (torch.nn.LSTM stores rows in order [i, f, g, o]; to import real torch
    weights, transpose and permute the gate blocks accordingly.)"""
    k = 1.0 / math.sqrt(hidden)
    k1, k2, k3, k4 = jax.random.split(key, 4)
    w_ih = jax.random.uniform(k1, (d_in, 4 * hidden), jnp.float32, -k, k)
    w_hh = jax.random.uniform(k2, (hidden, 4 * hidden), jnp.float32, -k, k)
    b = (jax.random.uniform(k3, (1, 4 * hidden), jnp.float32, -k, k)
         + jax.random.uniform(k4, (1, 4 * hidden), jnp.float32, -k, k))
    return w_ih.astype(jnp.bfloat16), w_hh.astype(jnp.bfloat16), b


def _init_head_params(key, t_seq, h3):
    d = t_seq * h3                                               # 80
    kf = 1.0 / math.sqrt(d)
    k1a, k1b, k2a, k2b = jax.random.split(key, 4)
    w1 = jax.random.uniform(k1a, (d, d), jnp.float32, -kf, kf)
    b1 = jax.random.uniform(k1b, (1, d), jnp.float32, -kf, kf)
    w2 = jax.random.uniform(k2a, (d, 1), jnp.float32, -kf, kf)
    b2 = jax.random.uniform(k2b, (1, 1), jnp.float32, -kf, kf)
    # Lane-pad fc1/fc2 outputs to 128 lanes; padded lanes stay exactly zero
    # (zero weight columns + zero bias + ReLU(0)=0), wrapper slices [:, :1].
    w1_p = jnp.zeros((d, FC_PAD), jnp.float32).at[:, :d].set(w1)
    b1_p = jnp.zeros((1, FC_PAD), jnp.float32).at[:, :d].set(b1)
    w2_p = jnp.zeros((FC_PAD, FC_PAD), jnp.float32).at[:d, :1].set(w2)
    b2_p = jnp.zeros((1, FC_PAD), jnp.float32).at[:, :1].set(b2)
    return (w1_p.astype(jnp.bfloat16), b1_p, w2_p.astype(jnp.bfloat16), b2_p)


def init_params(key):
    ks = jax.random.split(key, 4)
    return {
        "lstm1": _init_lstm_params(ks[0], D_IN, HIDDENS[0]),
        "lstm2": _init_lstm_params(ks[1], HIDDENS[0], HIDDENS[1]),
        "lstm3": _init_lstm_params(ks[2], HIDDENS[1], HIDDENS[2]),
        "head": _init_head_params(ks[3], T_SEQ, HIDDENS[2]),
    }


# --------------------------------------------------------------------------
# Full forward pass (matches LSTM.forward).  x: (B, T=5, 15) -> (B, 1)
# --------------------------------------------------------------------------
@jax.jit
def lstm_model_forward(x, params):
    B, T, D = x.shape

    # Fill the batch: pad to a multiple of 8 sublanes (free up to 8); for
    # large batches tile at 128 rows and shard tiles across TensorCores.
    tb = 128 if B > 128 else max(8, ((B + 7) // 8) * 8)
    n_tiles = (B + tb - 1) // tb
    b_pad = n_tiles * tb

    xp = jnp.zeros((b_pad, T, D), x.dtype).at[:B].set(x)
    # Time-major inside each batch tile so per-step rows are contiguous,
    # sublane-aligned slices of one (T*tb, D) block (done once, outside kernel).
    x_tm = (xp.reshape(n_tiles, tb, T, D)
              .transpose(0, 2, 1, 3)
              .reshape(n_tiles * T * tb, D))

    weights = (*params["lstm1"], *params["lstm2"], *params["lstm3"],
               *params["head"])
    kernel = functools.partial(_fused_lstm_kernel, seq_len=T, hiddens=HIDDENS)

    out = pl.pallas_call(
        kernel,
        out_shape=jax.ShapeDtypeStruct((b_pad, FC_PAD), jnp.float32),
        grid=(n_tiles,),
        in_specs=[pl.BlockSpec((T * tb, D), lambda i: (i, 0))]
                 + [pl.BlockSpec(w.shape, lambda i: (0, 0)) for w in weights],
        out_specs=pl.BlockSpec((tb, FC_PAD), lambda i: (i, 0)),
        scratch_shapes=[pltpu.VMEM((T * tb, HIDDENS[0]), jnp.float32),
                        pltpu.VMEM((T * tb, HIDDENS[1]), jnp.float32)],
        compiler_params=pltpu.CompilerParams(
            dimension_semantics=("parallel",)),
    )(x_tm, *weights)
    return out[:B, :1]


if __name__ == "__main__":
    key = jax.random.PRNGKey(0)
    kx, kp = jax.random.split(key)
    # seq_len must be 5 because classify expects 16*5 flattened features.
    x = jax.random.normal(kx, (2, T_SEQ, D_IN), jnp.float32)
    params = init_params(kp)

    out = lstm_model_forward(x, params)
    jax.block_until_ready(out)
    assert out.shape == (2, 1)
    print("KERNEL_OK")
</pallas_src>

<mosaic_0001>
module attributes {stable_mosaic.version = 11 : i64} {
  func.func @_fused_lstm_kernel(%arg0: i32, %arg1: memref<40x15xf32, #tpu.memory_space<vmem>>, %arg2: memref<15x256xbf16, #tpu.memory_space<vmem>>, %arg3: memref<64x256xbf16, #tpu.memory_space<vmem>>, %arg4: memref<1x256xf32, #tpu.memory_space<vmem>>, %arg5: memref<64x128xbf16, #tpu.memory_space<vmem>>, %arg6: memref<32x128xbf16, #tpu.memory_space<vmem>>, %arg7: memref<1x128xf32, #tpu.memory_space<vmem>>, %arg8: memref<32x64xbf16, #tpu.memory_space<vmem>>, %arg9: memref<16x64xbf16, #tpu.memory_space<vmem>>, %arg10: memref<1x64xf32, #tpu.memory_space<vmem>>, %arg11: memref<80x128xbf16, #tpu.memory_space<vmem>>, %arg12: memref<1x128xf32, #tpu.memory_space<vmem>>, %arg13: memref<128x128xbf16, #tpu.memory_space<vmem>>, %arg14: memref<1x128xf32, #tpu.memory_space<vmem>>, %arg15: memref<8x128xf32, #tpu.memory_space<vmem>>, %arg16: memref<40x64xf32, #tpu.memory_space<vmem>>, %arg17: memref<40x32xf32, #tpu.memory_space<vmem>>) attributes {dimension_semantics = [#tpu.dimension_semantics<parallel>], iteration_bounds = array<i64: 1>, scalar_prefetch = 0 : i64, scratch_operands = 2 : i64, tpu.core_type = #tpu.core_type<tc>, window_params = [{transform_indices = @transform_0, window_bounds = array<i64: 40, 15>}, {pipeline_mode = #tpu.pipeline_mode<synchronous>, transform_indices = @transform_1, window_bounds = array<i64: 15, 256>}, {pipeline_mode = #tpu.pipeline_mode<synchronous>, transform_indices = @transform_2, window_bounds = array<i64: 64, 256>}, {pipeline_mode = #tpu.pipeline_mode<synchronous>, transform_indices = @transform_3, window_bounds = array<i64: 1, 256>}, {pipeline_mode = #tpu.pipeline_mode<synchronous>, transform_indices = @transform_4, window_bounds = array<i64: 64, 128>}, {pipeline_mode = #tpu.pipeline_mode<synchronous>, transform_indices = @transform_5, window_bounds = array<i64: 32, 128>}, {pipeline_mode = #tpu.pipeline_mode<synchronous>, transform_indices = @transform_6, window_bounds = array<i64: 1, 128>}, {pipeline_mode = #tpu.pipeline_mode<synchronous>, transform_indices = @transform_7, window_bounds = array<i64: 32, 64>}, {pipeline_mode = #tpu.pipeline_mode<synchronous>, transform_indices = @transform_8, window_bounds = array<i64: 16, 64>}, {pipeline_mode = #tpu.pipeline_mode<synchronous>, transform_indices = @transform_9, window_bounds = array<i64: 1, 64>}, {pipeline_mode = #tpu.pipeline_mode<synchronous>, transform_indices = @transform_10, window_bounds = array<i64: 80, 128>}, {pipeline_mode = #tpu.pipeline_mode<synchronous>, transform_indices = @transform_11, window_bounds = array<i64: 1, 128>}, {pipeline_mode = #tpu.pipeline_mode<synchronous>, transform_indices = @transform_12, window_bounds = array<i64: 128, 128>}, {pipeline_mode = #tpu.pipeline_mode<synchronous>, transform_indices = @transform_13, window_bounds = array<i64: 1, 128>}, {transform_indices = @transform_14, window_bounds = array<i64: 8, 128>}]} {
    %c0 = arith.constant 0 : index
    %c0_0 = arith.constant 0 : index
    %0 = vector.load %arg1[%c0, %c0_0] : memref<40x15xf32, #tpu.memory_space<vmem>>, vector<40x15xf32>
    %c0_1 = arith.constant 0 : index
    %c0_2 = arith.constant 0 : index
    %1 = vector.load %arg3[%c0_1, %c0_2] : memref<64x256xbf16, #tpu.memory_space<vmem>>, vector<64x256xbf16>
    %2 = arith.truncf %0 : vector<40x15xf32> to vector<40x15xbf16>
    %c0_3 = arith.constant 0 : index
    %c0_4 = arith.constant 0 : index
    %3 = vector.load %arg2[%c0_3, %c0_4] : memref<15x256xbf16, #tpu.memory_space<vmem>>, vector<15x256xbf16>
    %cst = arith.constant dense<0.000000e+00> : vector<40x256xf32>
    %4 = tpu.matmul %2, %3, %cst {dimension_numbers = #tpu.dot_dimension_numbers<[1], [0], [0], [1], [0, 0, 1, 1], [], []>} : vector<40x15xbf16>, vector<15x256xbf16>, vector<40x256xf32> -> vector<40x256xf32>
    %c0_5 = arith.constant 0 : index
    %c0_6 = arith.constant 0 : index
    %5 = vector.load %arg4[%c0_5, %c0_6] : memref<1x256xf32, #tpu.memory_space<vmem>>, vector<1x256xf32>
    %6 = vector.broadcast %5 : vector<1x256xf32> to vector<40x256xf32>
    %7 = arith.addf %4, %6 : vector<40x256xf32>
    %cst_7 = arith.constant 0.000000e+00 : f32
    %8 = vector.broadcast %cst_7 : f32 to vector<8x64xf32>
    %cst_8 = arith.constant 0.000000e+00 : f32
    %9 = vector.broadcast %cst_8 : f32 to vector<8x64xf32>
    %10 = vector.extract_strided_slice %7 {offsets = [0, 0], sizes = [8, 256], strides = [1, 1]} : vector<40x256xf32> to vector<8x256xf32>
    %11 = arith.truncf %8 : vector<8x64xf32> to vector<8x64xbf16>
    %cst_9 = arith.constant dense<0.000000e+00> : vector<8x256xf32>
    %12 = tpu.matmul %11, %1, %cst_9 {dimension_numbers = #tpu.dot_dimension_numbers<[1], [0], [0], [1], [0, 0, 1, 1], [], []>} : vector<8x64xbf16>, vector<64x256xbf16>, vector<8x256xf32> -> vector<8x256xf32>
    %13 = arith.addf %10, %12 : vector<8x256xf32>
    %14 = vector.extract_strided_slice %13 {offsets = [0, 0], sizes = [8, 192], strides = [1, 1]} : vector<8x256xf32> to vector<8x192xf32>
    %cst_10 = arith.constant 5.000000e-01 : f32
    %15 = vector.broadcast %cst_10 : f32 to vector<8x192xf32>
    %16 = arith.mulf %15, %14 : vector<8x192xf32>
    %17 = math.tanh %16 : vector<8x192xf32>
    %cst_11 = arith.constant 5.000000e-01 : f32
    %18 = vector.broadcast %cst_11 : f32 to vector<8x192xf32>
    %19 = arith.mulf %18, %17 : vector<8x192xf32>
    %cst_12 = arith.constant 5.000000e-01 : f32
    %20 = vector.broadcast %cst_12 : f32 to vector<8x192xf32>
    %21 = arith.addf %19, %20 : vector<8x192xf32>
    %22 = vector.extract_strided_slice %21 {offsets = [0, 0], sizes = [8, 64], strides = [1, 1]} : vector<8x192xf32> to vector<8x64xf32>
    %23 = vector.extract_strided_slice %21 {offsets = [0, 64], sizes = [8, 64], strides = [1, 1]} : vector<8x192xf32> to vector<8x64xf32>
    %24 = vector.extract_strided_slice %21 {offsets = [0, 128], sizes = [8, 64], strides = [1, 1]} : vector<8x192xf32> to vector<8x64xf32>
    %25 = vector.extract_strided_slice %13 {offsets = [0, 192], sizes = [8, 64], strides = [1, 1]} : vector<8x256xf32> to vector<8x64xf32>
    %26 = math.tanh %25 : vector<8x64xf32>
    %27 = arith.mulf %23, %9 : vector<8x64xf32>
    %28 = arith.mulf %22, %26 : vector<8x64xf32>
    %29 = arith.addf %27, %28 : vector<8x64xf32>
    %30 = math.tanh %29 : vector<8x64xf32>
    %31 = arith.mulf %24, %30 : vector<8x64xf32>
    %32 = math.tanh %31 : vector<8x64xf32>
    %c0_13 = arith.constant 0 : index
    %c0_14 = arith.constant 0 : index
    %33 = vector.load %arg16[%c0_13, %c0_14] : memref<40x64xf32, #tpu.memory_space<vmem>>, vector<8x64xf32>
    tpu.vector_store %arg16[%c0_13, %c0_14], %32 {strides = array<i32>} : memref<40x64xf32, #tpu.memory_space<vmem>>, vector<8x64xf32>,
    %34 = vector.extract_strided_slice %7 {offsets = [8, 0], sizes = [8, 256], strides = [1, 1]} : vector<40x256xf32> to vector<8x256xf32>
    %35 = arith.truncf %31 : vector<8x64xf32> to vector<8x64xbf16>
    %cst_15 = arith.constant dense<0.000000e+00> : vector<8x256xf32>
    %36 = tpu.matmul %35, %1, %cst_15 {dimension_numbers = #tpu.dot_dimension_numbers<[1], [0], [0], [1], [0, 0, 1, 1], [], []>} : vector<8x64xbf16>, vector<64x256xbf16>, vector<8x256xf32> -> vector<8x256xf32>
    %37 = arith.addf %34, %36 : vector<8x256xf32>
    %38 = vector.extract_strided_slice %37 {offsets = [0, 0], sizes = [8, 192], strides = [1, 1]} : vector<8x256xf32> to vector<8x192xf32>
    %cst_16 = arith.constant 5.000000e-01 : f32
    %39 = vector.broadcast %cst_16 : f32 to vector<8x192xf32>
    %40 = arith.mulf %39, %38 : vector<8x192xf32>
    %41 = math.tanh %40 : vector<8x192xf32>
    %cst_17 = arith.constant 5.000000e-01 : f32
    %42 = vector.broadcast %cst_17 : f32 to vector<8x192xf32>
    %43 = arith.mulf %42, %41 : vector<8x192xf32>
    %cst_18 = arith.constant 5.000000e-01 : f32
    %44 = vector.broadcast %cst_18 : f32 to vector<8x192xf32>
    %45 = arith.addf %43, %44 : vector<8x192xf32>
    %46 = vector.extract_strided_slice %45 {offsets = [0, 0], sizes = [8, 64], strides = [1, 1]} : vector<8x192xf32> to vector<8x64xf32>
    %47 = vector.extract_strided_slice %45 {offsets = [0, 64], sizes = [8, 64], strides = [1, 1]} : vector<8x192xf32> to vector<8x64xf32>
    %48 = vector.extract_strided_slice %45 {offsets = [0, 128], sizes = [8, 64], strides = [1, 1]} : vector<8x192xf32> to vector<8x64xf32>
    %49 = vector.extract_strided_slice %37 {offsets = [0, 192], sizes = [8, 64], strides = [1, 1]} : vector<8x256xf32> to vector<8x64xf32>
    %50 = math.tanh %49 : vector<8x64xf32>
    %51 = arith.mulf %47, %29 : vector<8x64xf32>
    %52 = arith.mulf %46, %50 : vector<8x64xf32>
    %53 = arith.addf %51, %52 : vector<8x64xf32>
    %54 = math.tanh %53 : vector<8x64xf32>
    %55 = arith.mulf %48, %54 : vector<8x64xf32>
    %56 = math.tanh %55 : vector<8x64xf32>
    %c8 = arith.constant 8 : index
    %c0_19 = arith.constant 0 : index
    %57 = vector.load %arg16[%c8, %c0_19] : memref<40x64xf32, #tpu.memory_space<vmem>>, vector<8x64xf32>
    tpu.vector_store %arg16[%c8, %c0_19], %56 {strides = array<i32>} : memref<40x64xf32, #tpu.memory_space<vmem>>, vector<8x64xf32>,
    %58 = vector.extract_strided_slice %7 {offsets = [16, 0], sizes = [8, 256], strides = [1, 1]} : vector<40x256xf32> to vector<8x256xf32>
    %59 = arith.truncf %55 : vector<8x64xf32> to vector<8x64xbf16>
    %cst_20 = arith.constant dense<0.000000e+00> : vector<8x256xf32>
    %60 = tpu.matmul %59, %1, %cst_20 {dimension_numbers = #tpu.dot_dimension_numbers<[1], [0], [0], [1], [0, 0, 1, 1], [], []>} : vector<8x64xbf16>, vector<64x256xbf16>, vector<8x256xf32> -> vector<8x256xf32>
    %61 = arith.addf %58, %60 : vector<8x256xf32>
    %62 = vector.extract_strided_slice %61 {offsets = [0, 0], sizes = [8, 192], strides = [1, 1]} : vector<8x256xf32> to vector<8x192xf32>
    %cst_21 = arith.constant 5.000000e-01 : f32
    %63 = vector.broadcast %cst_21 : f32 to vector<8x192xf32>
    %64 = arith.mulf %63, %62 : vector<8x192xf32>
    %65 = math.tanh %64 : vector<8x192xf32>
    %cst_22 = arith.constant 5.000000e-01 : f32
    %66 = vector.broadcast %cst_22 : f32 to vector<8x192xf32>
    %67 = arith.mulf %66, %65 : vector<8x192xf32>
    %cst_23 = arith.constant 5.000000e-01 : f32
    %68 = vector.broadcast %cst_23 : f32 to vector<8x192xf32>
    %69 = arith.addf %67, %68 : vector<8x192xf32>
    %70 = vector.extract_strided_slice %69 {offsets = [0, 0], sizes = [8, 64], strides = [1, 1]} : vector<8x192xf32> to vector<8x64xf32>
    %71 = vector.extract_strided_slice %69 {offsets = [0, 64], sizes = [8, 64], strides = [1, 1]} : vector<8x192xf32> to vector<8x64xf32>
    %72 = vector.extract_strided_slice %69 {offsets = [0, 128], sizes = [8, 64], strides = [1, 1]} : vector<8x192xf32> to vector<8x64xf32>
    %73 = vector.extract_strided_slice %61 {offsets = [0, 192], sizes = [8, 64], strides = [1, 1]} : vector<8x256xf32> to vector<8x64xf32>
    %74 = math.tanh %73 : vector<8x64xf32>
    %75 = arith.mulf %71, %53 : vector<8x64xf32>
    %76 = arith.mulf %70, %74 : vector<8x64xf32>
    %77 = arith.addf %75, %76 : vector<8x64xf32>
    %78 = math.tanh %77 : vector<8x64xf32>
    %79 = arith.mulf %72, %78 : vector<8x64xf32>
    %80 = math.tanh %79 : vector<8x64xf32>
    %c16 = arith.constant 16 : index
    %c0_24 = arith.constant 0 : index
    %81 = vector.load %arg16[%c16, %c0_24] : memref<40x64xf32, #tpu.memory_space<vmem>>, vector<8x64xf32>
    tpu.vector_store %arg16[%c16, %c0_24], %80 {strides = array<i32>} : memref<40x64xf32, #tpu.memory_space<vmem>>, vector<8x64xf32>,
    %82 = vector.extract_strided_slice %7 {offsets = [24, 0], sizes = [8, 256], strides = [1, 1]} : vector<40x256xf32> to vector<8x256xf32>
    %83 = arith.truncf %79 : vector<8x64xf32> to vector<8x64xbf16>
    %cst_25 = arith.constant dense<0.000000e+00> : vector<8x256xf32>
    %84 = tpu.matmul %83, %1, %cst_25 {dimension_numbers = #tpu.dot_dimension_numbers<[1], [0], [0], [1], [0, 0, 1, 1], [], []>} : vector<8x64xbf16>, vector<64x256xbf16>, vector<8x256xf32> -> vector<8x256xf32>
    %85 = arith.addf %82, %84 : vector<8x256xf32>
    %86 = vector.extract_strided_slice %85 {offsets = [0, 0], sizes = [8, 192], strides = [1, 1]} : vector<8x256xf32> to vector<8x192xf32>
    %cst_26 = arith.constant 5.000000e-01 : f32
    %87 = vector.broadcast %cst_26 : f32 to vector<8x192xf32>
    %88 = arith.mulf %87, %86 : vector<8x192xf32>
    %89 = math.tanh %88 : vector<8x192xf32>
    %cst_27 = arith.constant 5.000000e-01 : f32
    %90 = vector.broadcast %cst_27 : f32 to vector<8x192xf32>
    %91 = arith.mulf %90, %89 : vector<8x192xf32>
    %cst_28 = arith.constant 5.000000e-01 : f32
    %92 = vector.broadcast %cst_28 : f32 to vector<8x192xf32>
    %93 = arith.addf %91, %92 : vector<8x192xf32>
    %94 = vector.extract_strided_slice %93 {offsets = [0, 0], sizes = [8, 64], strides = [1, 1]} : vector<8x192xf32> to vector<8x64xf32>
    %95 = vector.extract_strided_slice %93 {offsets = [0, 64], sizes = [8, 64], strides = [1, 1]} : vector<8x192xf32> to vector<8x64xf32>
    %96 = vector.extract_strided_slice %93 {offsets = [0, 128], sizes = [8, 64], strides = [1, 1]} : vector<8x192xf32> to vector<8x64xf32>
    %97 = vector.extract_strided_slice %85 {offsets = [0, 192], sizes = [8, 64], strides = [1, 1]} : vector<8x256xf32> to vector<8x64xf32>
    %98 = math.tanh %97 : vector<8x64xf32>
    %99 = arith.mulf %95, %77 : vector<8x64xf32>
    %100 = arith.mulf %94, %98 : vector<8x64xf32>
    %101 = arith.addf %99, %100 : vector<8x64xf32>
    %102 = math.tanh %101 : vector<8x64xf32>
    %103 = arith.mulf %96, %102 : vector<8x64xf32>
    %104 = math.tanh %103 : vector<8x64xf32>
    %c24 = arith.constant 24 : index
    %c0_29 = arith.constant 0 : index
    %105 = vector.load %arg16[%c24, %c0_29] : memref<40x64xf32, #tpu.memory_space<vmem>>, vector<8x64xf32>
    tpu.vector_store %arg16[%c24, %c0_29], %104 {strides = array<i32>} : memref<40x64xf32, #tpu.memory_space<vmem>>, vector<8x64xf32>,
    %106 = vector.extract_strided_slice %7 {offsets = [32, 0], sizes = [8, 256], strides = [1, 1]} : vector<40x256xf32> to vector<8x256xf32>
    %107 = arith.truncf %103 : vector<8x64xf32> to vector<8x64xbf16>
    %cst_30 = arith.constant dense<0.000000e+00> : vector<8x256xf32>
    %108 = tpu.matmul %107, %1, %cst_30 {dimension_numbers = #tpu.dot_dimension_numbers<[1], [0], [0], [1], [0, 0, 1, 1], [], []>} : vector<8x64xbf16>, vector<64x256xbf16>, vector<8x256xf32> -> vector<8x256xf32>
    %109 = arith.addf %106, %108 : vector<8x256xf32>
    %110 = vector.extract_strided_slice %109 {offsets = [0, 0], sizes = [8, 192], strides = [1, 1]} : vector<8x256xf32> to vector<8x192xf32>
    %cst_31 = arith.constant 5.000000e-01 : f32
    %111 = vector.broadcast %cst_31 : f32 to vector<8x192xf32>
    %112 = arith.mulf %111, %110 : vector<8x192xf32>
    %113 = math.tanh %112 : vector<8x192xf32>
    %cst_32 = arith.constant 5.000000e-01 : f32
    %114 = vector.broadcast %cst_32 : f32 to vector<8x192xf32>
    %115 = arith.mulf %114, %113 : vector<8x192xf32>
    %cst_33 = arith.constant 5.000000e-01 : f32
    %116 = vector.broadcast %cst_33 : f32 to vector<8x192xf32>
    %117 = arith.addf %115, %116 : vector<8x192xf32>
    %118 = vector.extract_strided_slice %117 {offsets = [0, 0], sizes = [8, 64], strides = [1, 1]} : vector<8x192xf32> to vector<8x64xf32>
    %119 = vector.extract_strided_slice %117 {offsets = [0, 64], sizes = [8, 64], strides = [1, 1]} : vector<8x192xf32> to vector<8x64xf32>
    %120 = vector.extract_strided_slice %117 {offsets = [0, 128], sizes = [8, 64], strides = [1, 1]} : vector<8x192xf32> to vector<8x64xf32>
    %121 = vector.extract_strided_slice %109 {offsets = [0, 192], sizes = [8, 64], strides = [1, 1]} : vector<8x256xf32> to vector<8x64xf32>
    %122 = math.tanh %121 : vector<8x64xf32>
    %123 = arith.mulf %119, %101 : vector<8x64xf32>
    %124 = arith.mulf %118, %122 : vector<8x64xf32>
    %125 = arith.addf %123, %124 : vector<8x64xf32>
    %126 = math.tanh %125 : vector<8x64xf32>
    %127 = arith.mulf %120, %126 : vector<8x64xf32>
    %128 = math.tanh %127 : vector<8x64xf32>
    %c32 = arith.constant 32 : index
    %c0_34 = arith.constant 0 : index
    %129 = vector.load %arg16[%c32, %c0_34] : memref<40x64xf32, #tpu.memory_space<vmem>>, vector<8x64xf32>
    tpu.vector_store %arg16[%c32, %c0_34], %128 {strides = array<i32>} : memref<40x64xf32, #tpu.memory_space<vmem>>, vector<8x64xf32>,
    %c0_35 = arith.constant 0 : index
    %c0_36 = arith.constant 0 : index
    %130 = vector.load %arg16[%c0_35, %c0_36] : memref<40x64xf32, #tpu.memory_space<vmem>>, vector<40x64xf32>
    %c0_37 = arith.constant 0 : index
    %c0_38 = arith.constant 0 : index
    %131 = vector.load %arg6[%c0_37, %c0_38] : memref<32x128xbf16, #tpu.memory_space<vmem>>, vector<32x128xbf16>
    %132 = arith.truncf %130 : vector<40x64xf32> to vector<40x64xbf16>
    %c0_39 = arith.constant 0 : index
    %c0_40 = arith.constant 0 : index
    %133 = vector.load %arg5[%c0_39, %c0_40] : memref<64x128xbf16, #tpu.memory_space<vmem>>, vector<64x128xbf16>
    %cst_41 = arith.constant dense<0.000000e+00> : vector<40x128xf32>
    %134 = tpu.matmul %132, %133, %cst_41 {dimension_numbers = #tpu.dot_dimension_numbers<[1], [0], [0], [1], [0, 0, 1, 1], [], []>} : vector<40x64xbf16>, vector<64x128xbf16>, vector<40x128xf32> -> vector<40x128xf32>
    %c0_42 = arith.constant 0 : index
    %c0_43 = arith.constant 0 : index
    %135 = vector.load %arg7[%c0_42, %c0_43] : memref<1x128xf32, #tpu.memory_space<vmem>>, vector<1x128xf32>
    %136 = vector.broadcast %135 : vector<1x128xf32> to vector<40x128xf32>
    %137 = arith.addf %134, %136 : vector<40x128xf32>
    %cst_44 = arith.constant 0.000000e+00 : f32
    %138 = vector.broadcast %cst_44 : f32 to vector<8x32xf32>
    %cst_45 = arith.constant 0.000000e+00 : f32
    %139 = vector.broadcast %cst_45 : f32 to vector<8x32xf32>
    %140 = vector.extract_strided_slice %137 {offsets = [0, 0], sizes = [8, 128], strides = [1, 1]} : vector<40x128xf32> to vector<8x128xf32>
    %141 = arith.truncf %138 : vector<8x32xf32> to vector<8x32xbf16>
    %cst_46 = arith.constant dense<0.000000e+00> : vector<8x128xf32>
    %142 = tpu.matmul %141, %131, %cst_46 {dimension_numbers = #tpu.dot_dimension_numbers<[1], [0], [0], [1], [0, 0, 1, 1], [], []>} : vector<8x32xbf16>, vector<32x128xbf16>, vector<8x128xf32> -> vector<8x128xf32>
    %143 = arith.addf %140, %142 : vector<8x128xf32>
    %144 = vector.extract_strided_slice %143 {offsets = [0, 0], sizes = [8, 96], strides = [1, 1]} : vector<8x128xf32> to vector<8x96xf32>
    %cst_47 = arith.constant 5.000000e-01 : f32
    %145 = vector.broadcast %cst_47 : f32 to vector<8x96xf32>
    %146 = arith.mulf %145, %144 : vector<8x96xf32>
    %147 = math.tanh %146 : vector<8x96xf32>
    %cst_48 = arith.constant 5.000000e-01 : f32
    %148 = vector.broadcast %cst_48 : f32 to vector<8x96xf32>
    %149 = arith.mulf %148, %147 : vector<8x96xf32>
    %cst_49 = arith.constant 5.000000e-01 : f32
    %150 = vector.broadcast %cst_49 : f32 to vector<8x96xf32>
    %151 = arith.addf %149, %150 : vector<8x96xf32>
    %152 = vector.extract_strided_slice %151 {offsets = [0, 0], sizes = [8, 32], strides = [1, 1]} : vector<8x96xf32> to vector<8x32xf32>
    %153 = vector.extract_strided_slice %151 {offsets = [0, 32], sizes = [8, 32], strides = [1, 1]} : vector<8x96xf32> to vector<8x32xf32>
    %154 = vector.extract_strided_slice %151 {offsets = [0, 64], sizes = [8, 32], strides = [1, 1]} : vector<8x96xf32> to vector<8x32xf32>
    %155 = vector.extract_strided_slice %143 {offsets = [0, 96], sizes = [8, 32], strides = [1, 1]} : vector<8x128xf32> to vector<8x32xf32>
    %156 = math.tanh %155 : vector<8x32xf32>
    %157 = arith.mulf %153, %139 : vector<8x32xf32>
    %158 = arith.mulf %152, %156 : vector<8x32xf32>
    %159 = arith.addf %157, %158 : vector<8x32xf32>
    %160 = math.tanh %159 : vector<8x32xf32>
    %161 = arith.mulf %154, %160 : vector<8x32xf32>
    %162 = math.tanh %161 : vector<8x32xf32>
    %c0_50 = arith.constant 0 : index
    %c0_51 = arith.constant 0 : index
    %163 = vector.load %arg17[%c0_50, %c0_51] : memref<40x32xf32, #tpu.memory_space<vmem>>, vector<8x32xf32>
    tpu.vector_store %arg17[%c0_50, %c0_51], %162 {strides = array<i32>} : memref<40x32xf32, #tpu.memory_space<vmem>>, vector<8x32xf32>,
    %164 = vector.extract_strided_slice %137 {offsets = [8, 0], sizes = [8, 128], strides = [1, 1]} : vector<40x128xf32> to vector<8x128xf32>
    %165 = arith.truncf %161 : vector<8x32xf32> to vector<8x32xbf16>
    %cst_52 = arith.constant dense<0.000000e+00> : vector<8x128xf32>
    %166 = tpu.matmul %165, %131, %cst_52 {dimension_numbers = #tpu.dot_dimension_numbers<[1], [0], [0], [1], [0, 0, 1, 1], [], []>} : vector<8x32xbf16>, vector<32x128xbf16>, vector<8x128xf32> -> vector<8x128xf32>
    %167 = arith.addf %164, %166 : vector<8x128xf32>
    %168 = vector.extract_strided_slice %167 {offsets = [0, 0], sizes = [8, 96], strides = [1, 1]} : vector<8x128xf32> to vector<8x96xf32>
    %cst_53 = arith.constant 5.000000e-01 : f32
    %169 = vector.broadcast %cst_53 : f32 to vector<8x96xf32>
    %170 = arith.mulf %169, %168 : vector<8x96xf32>
    %171 = math.tanh %170 : vector<8x96xf32>
    %cst_54 = arith.constant 5.000000e-01 : f32
    %172 = vector.broadcast %cst_54 : f32 to vector<8x96xf32>
    %173 = arith.mulf %172, %171 : vector<8x96xf32>
    %cst_55 = arith.constant 5.000000e-01 : f32
    %174 = vector.broadcast %cst_55 : f32 to vector<8x96xf32>
    %175 = arith.addf %173, %174 : vector<8x96xf32>
    %176 = vector.extract_strided_slice %175 {offsets = [0, 0], sizes = [8, 32], strides = [1, 1]} : vector<8x96xf32> to vector<8x32xf32>
    %177 = vector.extract_strided_slice %175 {offsets = [0, 32], sizes = [8, 32], strides = [1, 1]} : vector<8x96xf32> to vector<8x32xf32>
    %178 = vector.extract_strided_slice %175 {offsets = [0, 64], sizes = [8, 32], strides = [1, 1]} : vector<8x96xf32> to vector<8x32xf32>
    %179 = vector.extract_strided_slice %167 {offsets = [0, 96], sizes = [8, 32], strides = [1, 1]} : vector<8x128xf32> to vector<8x32xf32>
    %180 = math.tanh %179 : vector<8x32xf32>
    %181 = arith.mulf %177, %159 : vector<8x32xf32>
    %182 = arith.mulf %176, %180 : vector<8x32xf32>
    %183 = arith.addf %181, %182 : vector<8x32xf32>
    %184 = math.tanh %183 : vector<8x32xf32>
    %185 = arith.mulf %178, %184 : vector<8x32xf32>
    %186 = math.tanh %185 : vector<8x32xf32>
    %c8_56 = arith.constant 8 : index
    %c0_57 = arith.constant 0 : index
    %187 = vector.load %arg17[%c8_56, %c0_57] : memref<40x32xf32, #tpu.memory_space<vmem>>, vector<8x32xf32>
    tpu.vector_store %arg17[%c8_56, %c0_57], %186 {strides = array<i32>} : memref<40x32xf32, #tpu.memory_space<vmem>>, vector<8x32xf32>,
    %188 = vector.extract_strided_slice %137 {offsets = [16, 0], sizes = [8, 128], strides = [1, 1]} : vector<40x128xf32> to vector<8x128xf32>
    %189 = arith.truncf %185 : vector<8x32xf32> to vector<8x32xbf16>
    %cst_58 = arith.constant dense<0.000000e+00> : vector<8x128xf32>
    %190 = tpu.matmul %189, %131, %cst_58 {dimension_numbers = #tpu.dot_dimension_numbers<[1], [0], [0], [1], [0, 0, 1, 1], [], []>} : vector<8x32xbf16>, vector<32x128xbf16>, vector<8x128xf32> -> vector<8x128xf32>
    %191 = arith.addf %188, %190 : vector<8x128xf32>
    %192 = vector.extract_strided_slice %191 {offsets = [0, 0], sizes = [8, 96], strides = [1, 1]} : vector<8x128xf32> to vector<8x96xf32>
    %cst_59 = arith.constant 5.000000e-01 : f32
    %193 = vector.broadcast %cst_59 : f32 to vector<8x96xf32>
    %194 = arith.mulf %193, %192 : vector<8x96xf32>
    %195 = math.tanh %194 : vector<8x96xf32>
    %cst_60 = arith.constant 5.000000e-01 : f32
    %196 = vector.broadcast %cst_60 : f32 to vector<8x96xf32>
    %197 = arith.mulf %196, %195 : vector<8x96xf32>
    %cst_61 = arith.constant 5.000000e-01 : f32
    %198 = vector.broadcast %cst_61 : f32 to vector<8x96xf32>
    %199 = arith.addf %197, %198 : vector<8x96xf32>
    %200 = vector.extract_strided_slice %199 {offsets = [0, 0], sizes = [8, 32], strides = [1, 1]} : vector<8x96xf32> to vector<8x32xf32>
    %201 = vector.extract_strided_slice %199 {offsets = [0, 32], sizes = [8, 32], strides = [1, 1]} : vector<8x96xf32> to vector<8x32xf32>
    %202 = vector.extract_strided_slice %199 {offsets = [0, 64], sizes = [8, 32], strides = [1, 1]} : vector<8x96xf32> to vector<8x32xf32>
    %203 = vector.extract_strided_slice %191 {offsets = [0, 96], sizes = [8, 32], strides = [1, 1]} : vector<8x128xf32> to vector<8x32xf32>
    %204 = math.tanh %203 : vector<8x32xf32>
    %205 = arith.mulf %201, %183 : vector<8x32xf32>
    %206 = arith.mulf %200, %204 : vector<8x32xf32>
    %207 = arith.addf %205, %206 : vector<8x32xf32>
    %208 = math.tanh %207 : vector<8x32xf32>
    %209 = arith.mulf %202, %208 : vector<8x32xf32>
    %210 = math.tanh %209 : vector<8x32xf32>
    %c16_62 = arith.constant 16 : index
    %c0_63 = arith.constant 0 : index
    %211 = vector.load %arg17[%c16_62, %c0_63] : memref<40x32xf32, #tpu.memory_space<vmem>>, vector<8x32xf32>
    tpu.vector_store %arg17[%c16_62, %c0_63], %210 {strides = array<i32>} : memref<40x32xf32, #tpu.memory_space<vmem>>, vector<8x32xf32>,
    %212 = vector.extract_strided_slice %137 {offsets = [24, 0], sizes = [8, 128], strides = [1, 1]} : vector<40x128xf32> to vector<8x128xf32>
    %213 = arith.truncf %209 : vector<8x32xf32> to vector<8x32xbf16>
    %cst_64 = arith.constant dense<0.000000e+00> : vector<8x128xf32>
    %214 = tpu.matmul %213, %131, %cst_64 {dimension_numbers = #tpu.dot_dimension_numbers<[1], [0], [0], [1], [0, 0, 1, 1], [], []>} : vector<8x32xbf16>, vector<32x128xbf16>, vector<8x128xf32> -> vector<8x128xf32>
    %215 = arith.addf %212, %214 : vector<8x128xf32>
    %216 = vector.extract_strided_slice %215 {offsets = [0, 0], sizes = [8, 96], strides = [1, 1]} : vector<8x128xf32> to vector<8x96xf32>
    %cst_65 = arith.constant 5.000000e-01 : f32
    %217 = vector.broadcast %cst_65 : f32 to vector<8x96xf32>
    %218 = arith.mulf %217, %216 : vector<8x96xf32>
    %219 = math.tanh %218 : vector<8x96xf32>
    %cst_66 = arith.constant 5.000000e-01 : f32
    %220 = vector.broadcast %cst_66 : f32 to vector<8x96xf32>
    %221 = arith.mulf %220, %219 : vector<8x96xf32>
    %cst_67 = arith.constant 5.000000e-01 : f32
    %222 = vector.broadcast %cst_67 : f32 to vector<8x96xf32>
    %223 = arith.addf %221, %222 : vector<8x96xf32>
    %224 = vector.extract_strided_slice %223 {offsets = [0, 0], sizes = [8, 32], strides = [1, 1]} : vector<8x96xf32> to vector<8x32xf32>
    %225 = vector.extract_strided_slice %223 {offsets = [0, 32], sizes = [8, 32], strides = [1, 1]} : vector<8x96xf32> to vector<8x32xf32>
    %226 = vector.extract_strided_slice %223 {offsets = [0, 64], sizes = [8, 32], strides = [1, 1]} : vector<8x96xf32> to vector<8x32xf32>
    %227 = vector.extract_strided_slice %215 {offsets = [0, 96], sizes = [8, 32], strides = [1, 1]} : vector<8x128xf32> to vector<8x32xf32>
    %228 = math.tanh %227 : vector<8x32xf32>
    %229 = arith.mulf %225, %207 : vector<8x32xf32>
    %230 = arith.mulf %224, %228 : vector<8x32xf32>
    %231 = arith.addf %229, %230 : vector<8x32xf32>
    %232 = math.tanh %231 : vector<8x32xf32>
    %233 = arith.mulf %226, %232 : vector<8x32xf32>
    %234 = math.tanh %233 : vector<8x32xf32>
    %c24_68 = arith.constant 24 : index
    %c0_69 = arith.constant 0 : index
    %235 = vector.load %arg17[%c24_68, %c0_69] : memref<40x32xf32, #tpu.memory_space<vmem>>, vector<8x32xf32>
    tpu.vector_store %arg17[%c24_68, %c0_69], %234 {strides = array<i32>} : memref<40x32xf32, #tpu.memory_space<vmem>>, vector<8x32xf32>,
    %236 = vector.extract_strided_slice %137 {offsets = [32, 0], sizes = [8, 128], strides = [1, 1]} : vector<40x128xf32> to vector<8x128xf32>
    %237 = arith.truncf %233 : vector<8x32xf32> to vector<8x32xbf16>
    %cst_70 = arith.constant dense<0.000000e+00> : vector<8x128xf32>
    %238 = tpu.matmul %237, %131, %cst_70 {dimension_numbers = #tpu.dot_dimension_numbers<[1], [0], [0], [1], [0, 0, 1, 1], [], []>} : vector<8x32xbf16>, vector<32x128xbf16>, vector<8x128xf32> -> vector<8x128xf32>
    %239 = arith.addf %236, %238 : vector<8x128xf32>
    %240 = vector.extract_strided_slice %239 {offsets = [0, 0], sizes = [8, 96], strides = [1, 1]} : vector<8x128xf32> to vector<8x96xf32>
    %cst_71 = arith.constant 5.000000e-01 : f32
    %241 = vector.broadcast %cst_71 : f32 to vector<8x96xf32>
    %242 = arith.mulf %241, %240 : vector<8x96xf32>
    %243 = math.tanh %242 : vector<8x96xf32>
    %cst_72 = arith.constant 5.000000e-01 : f32
    %244 = vector.broadcast %cst_72 : f32 to vector<8x96xf32>
    %245 = arith.mulf %244, %243 : vector<8x96xf32>
    %cst_73 = arith.constant 5.000000e-01 : f32
    %246 = vector.broadcast %cst_73 : f32 to vector<8x96xf32>
    %247 = arith.addf %245, %246 : vector<8x96xf32>
    %248 = vector.extract_strided_slice %247 {offsets = [0, 0], sizes = [8, 32], strides = [1, 1]} : vector<8x96xf32> to vector<8x32xf32>
    %249 = vector.extract_strided_slice %247 {offsets = [0, 32], sizes = [8, 32], strides = [1, 1]} : vector<8x96xf32> to vector<8x32xf32>
    %250 = vector.extract_strided_slice %247 {offsets = [0, 64], sizes = [8, 32], strides = [1, 1]} : vector<8x96xf32> to vector<8x32xf32>
    %251 = vector.extract_strided_slice %239 {offsets = [0, 96], sizes = [8, 32], strides = [1, 1]} : vector<8x128xf32> to vector<8x32xf32>
    %252 = math.tanh %251 : vector<8x32xf32>
    %253 = arith.mulf %249, %231 : vector<8x32xf32>
    %254 = arith.mulf %248, %252 : vector<8x32xf32>
    %255 = arith.addf %253, %254 : vector<8x32xf32>
    %256 = math.tanh %255 : vector<8x32xf32>
    %257 = arith.mulf %250, %256 : vector<8x32xf32>
    %258 = math.tanh %257 : vector<8x32xf32>
    %c32_74 = arith.constant 32 : index
    %c0_75 = arith.constant 0 : index
    %259 = vector.load %arg17[%c32_74, %c0_75] : memref<40x32xf32, #tpu.memory_space<vmem>>, vector<8x32xf32>
    tpu.vector_store %arg17[%c32_74, %c0_75], %258 {strides = array<i32>} : memref<40x32xf32, #tpu.memory_space<vmem>>, vector<8x32xf32>,
    %c0_76 = arith.constant 0 : index
    %c0_77 = arith.constant 0 : index
    %260 = vector.load %arg17[%c0_76, %c0_77] : memref<40x32xf32, #tpu.memory_space<vmem>>, vector<40x32xf32>
    %c0_78 = arith.constant 0 : index
    %c0_79 = arith.constant 0 : index
    %261 = vector.load %arg9[%c0_78, %c0_79] : memref<16x64xbf16, #tpu.memory_space<vmem>>, vector<16x64xbf16>
    %262 = arith.truncf %260 : vector<40x32xf32> to vector<40x32xbf16>
    %c0_80 = arith.constant 0 : index
    %c0_81 = arith.constant 0 : index
    %263 = vector.load %arg8[%c0_80, %c0_81] : memref<32x64xbf16, #tpu.memory_space<vmem>>, vector<32x64xbf16>
    %cst_82 = arith.constant dense<0.000000e+00> : vector<40x64xf32>
    %264 = tpu.matmul %262, %263, %cst_82 {dimension_numbers = #tpu.dot_dimension_numbers<[1], [0], [0], [1], [0, 0, 1, 1], [], []>} : vector<40x32xbf16>, vector<32x64xbf16>, vector<40x64xf32> -> vector<40x64xf32>
    %c0_83 = arith.constant 0 : index
    %c0_84 = arith.constant 0 : index
    %265 = vector.load %arg10[%c0_83, %c0_84] : memref<1x64xf32, #tpu.memory_space<vmem>>, vector<1x64xf32>
    %266 = vector.broadcast %265 : vector<1x64xf32> to vector<40x64xf32>
    %267 = arith.addf %264, %266 : vector<40x64xf32>
    %cst_85 = arith.constant 0.000000e+00 : f32
    %268 = vector.broadcast %cst_85 : f32 to vector<8x16xf32>
    %cst_86 = arith.constant 0.000000e+00 : f32
    %269 = vector.broadcast %cst_86 : f32 to vector<8x16xf32>
    %270 = vector.extract_strided_slice %267 {offsets = [0, 0], sizes = [8, 64], strides = [1, 1]} : vector<40x64xf32> to vector<8x64xf32>
    %271 = arith.truncf %268 : vector<8x16xf32> to vector<8x16xbf16>
    %cst_87 = arith.constant dense<0.000000e+00> : vector<8x64xf32>
    %272 = tpu.matmul %271, %261, %cst_87 {dimension_numbers = #tpu.dot_dimension_numbers<[1], [0], [0], [1], [0, 0, 1, 1], [], []>} : vector<8x16xbf16>, vector<16x64xbf16>, vector<8x64xf32> -> vector<8x64xf32>
    %273 = arith.addf %270, %272 : vector<8x64xf32>
    %274 = vector.extract_strided_slice %273 {offsets = [0, 0], sizes = [8, 48], strides = [1, 1]} : vector<8x64xf32> to vector<8x48xf32>
    %cst_88 = arith.constant 5.000000e-01 : f32
    %275 = vector.broadcast %cst_88 : f32 to vector<8x48xf32>
    %276 = arith.mulf %275, %274 : vector<8x48xf32>
    %277 = math.tanh %276 : vector<8x48xf32>
    %cst_89 = arith.constant 5.000000e-01 : f32
    %278 = vector.broadcast %cst_89 : f32 to vector<8x48xf32>
    %279 = arith.mulf %278, %277 : vector<8x48xf32>
    %cst_90 = arith.constant 5.000000e-01 : f32
    %280 = vector.broadcast %cst_90 : f32 to vector<8x48xf32>
    %281 = arith.addf %279, %280 : vector<8x48xf32>
    %282 = vector.extract_strided_slice %281 {offsets = [0, 0], sizes = [8, 16], strides = [1, 1]} : vector<8x48xf32> to vector<8x16xf32>
    %283 = vector.extract_strided_slice %281 {offsets = [0, 16], sizes = [8, 16], strides = [1, 1]} : vector<8x48xf32> to vector<8x16xf32>
    %284 = vector.extract_strided_slice %281 {offsets = [0, 32], sizes = [8, 16], strides = [1, 1]} : vector<8x48xf32> to vector<8x16xf32>
    %285 = vector.extract_strided_slice %273 {offsets = [0, 48], sizes = [8, 16], strides = [1, 1]} : vector<8x64xf32> to vector<8x16xf32>
    %286 = math.tanh %285 : vector<8x16xf32>
    %287 = arith.mulf %283, %269 : vector<8x16xf32>
    %288 = arith.mulf %282, %286 : vector<8x16xf32>
    %289 = arith.addf %287, %288 : vector<8x16xf32>
    %290 = math.tanh %289 : vector<8x16xf32>
    %291 = arith.mulf %284, %290 : vector<8x16xf32>
    %292 = vector.extract_strided_slice %267 {offsets = [8, 0], sizes = [8, 64], strides = [1, 1]} : vector<40x64xf32> to vector<8x64xf32>
    %293 = arith.truncf %291 : vector<8x16xf32> to vector<8x16xbf16>
    %cst_91 = arith.constant dense<0.000000e+00> : vector<8x64xf32>
    %294 = tpu.matmul %293, %261, %cst_91 {dimension_numbers = #tpu.dot_dimension_numbers<[1], [0], [0], [1], [0, 0, 1, 1], [], []>} : vector<8x16xbf16>, vector<16x64xbf16>, vector<8x64xf32> -> vector<8x64xf32>
    %295 = arith.addf %292, %294 : vector<8x64xf32>
    %296 = vector.extract_strided_slice %295 {offsets = [0, 0], sizes = [8, 48], strides = [1, 1]} : vector<8x64xf32> to vector<8x48xf32>
    %cst_92 = arith.constant 5.000000e-01 : f32
    %297 = vector.broadcast %cst_92 : f32 to vector<8x48xf32>
    %298 = arith.mulf %297, %296 : vector<8x48xf32>
    %299 = math.tanh %298 : vector<8x48xf32>
    %cst_93 = arith.constant 5.000000e-01 : f32
    %300 = vector.broadcast %cst_93 : f32 to vector<8x48xf32>
    %301 = arith.mulf %300, %299 : vector<8x48xf32>
    %cst_94 = arith.constant 5.000000e-01 : f32
    %302 = vector.broadcast %cst_94 : f32 to vector<8x48xf32>
    %303 = arith.addf %301, %302 : vector<8x48xf32>
    %304 = vector.extract_strided_slice %303 {offsets = [0, 0], sizes = [8, 16], strides = [1, 1]} : vector<8x48xf32> to vector<8x16xf32>
    %305 = vector.extract_strided_slice %303 {offsets = [0, 16], sizes = [8, 16], strides = [1, 1]} : vector<8x48xf32> to vector<8x16xf32>
    %306 = vector.extract_strided_slice %303 {offsets = [0, 32], sizes = [8, 16], strides = [1, 1]} : vector<8x48xf32> to vector<8x16xf32>
    %307 = vector.extract_strided_slice %295 {offsets = [0, 48], sizes = [8, 16], strides = [1, 1]} : vector<8x64xf32> to vector<8x16xf32>
    %308 = math.tanh %307 : vector<8x16xf32>
    %309 = arith.mulf %305, %289 : vector<8x16xf32>
    %310 = arith.mulf %304, %308 : vector<8x16xf32>
    %311 = arith.addf %309, %310 : vector<8x16xf32>
    %312 = math.tanh %311 : vector<8x16xf32>
    %313 = arith.mulf %306, %312 : vector<8x16xf32>
    %314 = vector.extract_strided_slice %267 {offsets = [16, 0], sizes = [8, 64], strides = [1, 1]} : vector<40x64xf32> to vector<8x64xf32>
    %315 = arith.truncf %313 : vector<8x16xf32> to vector<8x16xbf16>
    %cst_95 = arith.constant dense<0.000000e+00> : vector<8x64xf32>
    %316 = tpu.matmul %315, %261, %cst_95 {dimension_numbers = #tpu.dot_dimension_numbers<[1], [0], [0], [1], [0, 0, 1, 1], [], []>} : vector<8x16xbf16>, vector<16x64xbf16>, vector<8x64xf32> -> vector<8x64xf32>
    %317 = arith.addf %314, %316 : vector<8x64xf32>
    %318 = vector.extract_strided_slice %317 {offsets = [0, 0], sizes = [8, 48], strides = [1, 1]} : vector<8x64xf32> to vector<8x48xf32>
    %cst_96 = arith.constant 5.000000e-01 : f32
    %319 = vector.broadcast %cst_96 : f32 to vector<8x48xf32>
    %320 = arith.mulf %319, %318 : vector<8x48xf32>
    %321 = math.tanh %320 : vector<8x48xf32>
    %cst_97 = arith.constant 5.000000e-01 : f32
    %322 = vector.broadcast %cst_97 : f32 to vector<8x48xf32>
    %323 = arith.mulf %322, %321 : vector<8x48xf32>
    %cst_98 = arith.constant 5.000000e-01 : f32
    %324 = vector.broadcast %cst_98 : f32 to vector<8x48xf32>
    %325 = arith.addf %323, %324 : vector<8x48xf32>
    %326 = vector.extract_strided_slice %325 {offsets = [0, 0], sizes = [8, 16], strides = [1, 1]} : vector<8x48xf32> to vector<8x16xf32>
    %327 = vector.extract_strided_slice %325 {offsets = [0, 16], sizes = [8, 16], strides = [1, 1]} : vector<8x48xf32> to vector<8x16xf32>
    %328 = vector.extract_strided_slice %325 {offsets = [0, 32], sizes = [8, 16], strides = [1, 1]} : vector<8x48xf32> to vector<8x16xf32>
    %329 = vector.extract_strided_slice %317 {offsets = [0, 48], sizes = [8, 16], strides = [1, 1]} : vector<8x64xf32> to vector<8x16xf32>
    %330 = math.tanh %329 : vector<8x16xf32>
    %331 = arith.mulf %327, %311 : vector<8x16xf32>
    %332 = arith.mulf %326, %330 : vector<8x16xf32>
    %333 = arith.addf %331, %332 : vector<8x16xf32>
    %334 = math.tanh %333 : vector<8x16xf32>
    %335 = arith.mulf %328, %334 : vector<8x16xf32>
    %336 = vector.extract_strided_slice %267 {offsets = [24, 0], sizes = [8, 64], strides = [1, 1]} : vector<40x64xf32> to vector<8x64xf32>
    %337 = arith.truncf %335 : vector<8x16xf32> to vector<8x16xbf16>
    %cst_99 = arith.constant dense<0.000000e+00> : vector<8x64xf32>
    %338 = tpu.matmul %337, %261, %cst_99 {dimension_numbers = #tpu.dot_dimension_numbers<[1], [0], [0], [1], [0, 0, 1, 1], [], []>} : vector<8x16xbf16>, vector<16x64xbf16>, vector<8x64xf32> -> vector<8x64xf32>
    %339 = arith.addf %336, %338 : vector<8x64xf32>
    %340 = vector.extract_strided_slice %339 {offsets = [0, 0], sizes = [8, 48], strides = [1, 1]} : vector<8x64xf32> to vector<8x48xf32>
    %cst_100 = arith.constant 5.000000e-01 : f32
    %341 = vector.broadcast %cst_100 : f32 to vector<8x48xf32>
    %342 = arith.mulf %341, %340 : vector<8x48xf32>
    %343 = math.tanh %342 : vector<8x48xf32>
    %cst_101 = arith.constant 5.000000e-01 : f32
    %344 = vector.broadcast %cst_101 : f32 to vector<8x48xf32>
    %345 = arith.mulf %344, %343 : vector<8x48xf32>
    %cst_102 = arith.constant 5.000000e-01 : f32
    %346 = vector.broadcast %cst_102 : f32 to vector<8x48xf32>
    %347 = arith.addf %345, %346 : vector<8x48xf32>
    %348 = vector.extract_strided_slice %347 {offsets = [0, 0], sizes = [8, 16], strides = [1, 1]} : vector<8x48xf32> to vector<8x16xf32>
    %349 = vector.extract_strided_slice %347 {offsets = [0, 16], sizes = [8, 16], strides = [1, 1]} : vector<8x48xf32> to vector<8x16xf32>
    %350 = vector.extract_strided_slice %347 {offsets = [0, 32], sizes = [8, 16], strides = [1, 1]} : vector<8x48xf32> to vector<8x16xf32>
    %351 = vector.extract_strided_slice %339 {offsets = [0, 48], sizes = [8, 16], strides = [1, 1]} : vector<8x64xf32> to vector<8x16xf32>
    %352 = math.tanh %351 : vector<8x16xf32>
    %353 = arith.mulf %349, %333 : vector<8x16xf32>
    %354 = arith.mulf %348, %352 : vector<8x16xf32>
    %355 = arith.addf %353, %354 : vector<8x16xf32>
    %356 = math.tanh %355 : vector<8x16xf32>
    %357 = arith.mulf %350, %356 : vector<8x16xf32>
    %358 = vector.extract_strided_slice %267 {offsets = [32, 0], sizes = [8, 64], strides = [1, 1]} : vector<40x64xf32> to vector<8x64xf32>
    %359 = arith.truncf %357 : vector<8x16xf32> to vector<8x16xbf16>
    %cst_103 = arith.constant dense<0.000000e+00> : vector<8x64xf32>
    %360 = tpu.matmul %359, %261, %cst_103 {dimension_numbers = #tpu.dot_dimension_numbers<[1], [0], [0], [1], [0, 0, 1, 1], [], []>} : vector<8x16xbf16>, vector<16x64xbf16>, vector<8x64xf32> -> vector<8x64xf32>
    %361 = arith.addf %358, %360 : vector<8x64xf32>
    %362 = vector.extract_strided_slice %361 {offsets = [0, 0], sizes = [8, 48], strides = [1, 1]} : vector<8x64xf32> to vector<8x48xf32>
    %cst_104 = arith.constant 5.000000e-01 : f32
    %363 = vector.broadcast %cst_104 : f32 to vector<8x48xf32>
    %364 = arith.mulf %363, %362 : vector<8x48xf32>
    %365 = math.tanh %364 : vector<8x48xf32>
    %cst_105 = arith.constant 5.000000e-01 : f32
    %366 = vector.broadcast %cst_105 : f32 to vector<8x48xf32>
    %367 = arith.mulf %366, %365 : vector<8x48xf32>
    %cst_106 = arith.constant 5.000000e-01 : f32
    %368 = vector.broadcast %cst_106 : f32 to vector<8x48xf32>
    %369 = arith.addf %367, %368 : vector<8x48xf32>
    %370 = vector.extract_strided_slice %369 {offsets = [0, 0], sizes = [8, 16], strides = [1, 1]} : vector<8x48xf32> to vector<8x16xf32>
    %371 = vector.extract_strided_slice %369 {offsets = [0, 16], sizes = [8, 16], strides = [1, 1]} : vector<8x48xf32> to vector<8x16xf32>
    %372 = vector.extract_strided_slice %369 {offsets = [0, 32], sizes = [8, 16], strides = [1, 1]} : vector<8x48xf32> to vector<8x16xf32>
    %373 = vector.extract_strided_slice %361 {offsets = [0, 48], sizes = [8, 16], strides = [1, 1]} : vector<8x64xf32> to vector<8x16xf32>
    %374 = math.tanh %373 : vector<8x16xf32>
    %375 = arith.mulf %371, %355 : vector<8x16xf32>
    %376 = arith.mulf %370, %374 : vector<8x16xf32>
    %377 = arith.addf %375, %376 : vector<8x16xf32>
    %378 = math.tanh %377 : vector<8x16xf32>
    %379 = arith.mulf %372, %378 : vector<8x16xf32>
    %c0_107 = arith.constant 0 : index
    %c0_108 = arith.constant 0 : index
    %380 = vector.load %arg11[%c0_107, %c0_108] : memref<80x128xbf16, #tpu.memory_space<vmem>>, vector<80x128xbf16>
    %381 = arith.truncf %291 : vector<8x16xf32> to vector<8x16xbf16>
    %382 = vector.extract_strided_slice %380 {offsets = [0, 0], sizes = [16, 128], strides = [1, 1]} : vector<80x128xbf16> to vector<16x128xbf16>
    %cst_109 = arith.constant dense<0.000000e+00> : vector<8x128xf32>
    %383 = tpu.matmul %381, %382, %cst_109 {dimension_numbers = #tpu.dot_dimension_numbers<[1], [0], [0], [1], [0, 0, 1, 1], [], []>} : vector<8x16xbf16>, vector<16x128xbf16>, vector<8x128xf32> -> vector<8x128xf32>
    %384 = arith.truncf %313 : vector<8x16xf32> to vector<8x16xbf16>
    %385 = vector.extract_strided_slice %380 {offsets = [16, 0], sizes = [16, 128], strides = [1, 1]} : vector<80x128xbf16> to vector<16x128xbf16>
    %cst_110 = arith.constant dense<0.000000e+00> : vector<8x128xf32>
    %386 = tpu.matmul %384, %385, %cst_110 {dimension_numbers = #tpu.dot_dimension_numbers<[1], [0], [0], [1], [0, 0, 1, 1], [], []>} : vector<8x16xbf16>, vector<16x128xbf16>, vector<8x128xf32> -> vector<8x128xf32>
    %387 = arith.truncf %335 : vector<8x16xf32> to vector<8x16xbf16>
    %388 = vector.extract_strided_slice %380 {offsets = [32, 0], sizes = [16, 128], strides = [1, 1]} : vector<80x128xbf16> to vector<16x128xbf16>
    %cst_111 = arith.constant dense<0.000000e+00> : vector<8x128xf32>
    %389 = tpu.matmul %387, %388, %cst_111 {dimension_numbers = #tpu.dot_dimension_numbers<[1], [0], [0], [1], [0, 0, 1, 1], [], []>} : vector<8x16xbf16>, vector<16x128xbf16>, vector<8x128xf32> -> vector<8x128xf32>
    %390 = arith.truncf %357 : vector<8x16xf32> to vector<8x16xbf16>
    %391 = vector.extract_strided_slice %380 {offsets = [48, 0], sizes = [16, 128], strides = [1, 1]} : vector<80x128xbf16> to vector<16x128xbf16>
    %cst_112 = arith.constant dense<0.000000e+00> : vector<8x128xf32>
    %392 = tpu.matmul %390, %391, %cst_112 {dimension_numbers = #tpu.dot_dimension_numbers<[1], [0], [0], [1], [0, 0, 1, 1], [], []>} : vector<8x16xbf16>, vector<16x128xbf16>, vector<8x128xf32> -> vector<8x128xf32>
    %393 = arith.truncf %379 : vector<8x16xf32> to vector<8x16xbf16>
    %394 = vector.extract_strided_slice %380 {offsets = [64, 0], sizes = [16, 128], strides = [1, 1]} : vector<80x128xbf16> to vector<16x128xbf16>
    %cst_113 = arith.constant dense<0.000000e+00> : vector<8x128xf32>
    %395 = tpu.matmul %393, %394, %cst_113 {dimension_numbers = #tpu.dot_dimension_numbers<[1], [0], [0], [1], [0, 0, 1, 1], [], []>} : vector<8x16xbf16>, vector<16x128xbf16>, vector<8x128xf32> -> vector<8x128xf32>
    %396 = arith.addf %383, %386 : vector<8x128xf32>
    %397 = arith.addf %389, %392 : vector<8x128xf32>
    %398 = arith.addf %396, %397 : vector<8x128xf32>
    %399 = arith.addf %398, %395 : vector<8x128xf32>
    %c0_114 = arith.constant 0 : index
    %c0_115 = arith.constant 0 : index
    %400 = vector.load %arg12[%c0_114, %c0_115] : memref<1x128xf32, #tpu.memory_space<vmem>>, vector<1x128xf32>
    %401 = vector.broadcast %400 : vector<1x128xf32> to vector<8x128xf32>
    %402 = arith.addf %399, %401 : vector<8x128xf32>
    %cst_116 = arith.constant 0.000000e+00 : f32
    %403 = vector.broadcast %cst_116 : f32 to vector<8x128xf32>
    %404 = arith.maximumf %402, %403 : vector<8x128xf32>
    %405 = arith.truncf %404 : vector<8x128xf32> to vector<8x128xbf16>
    %c0_117 = arith.constant 0 : index
    %c0_118 = arith.constant 0 : index
    %406 = vector.load %arg13[%c0_117, %c0_118] : memref<128x128xbf16, #tpu.memory_space<vmem>>, vector<128x128xbf16>
    %cst_119 = arith.constant dense<0.000000e+00> : vector<8x128xf32>
    %407 = tpu.matmul %405, %406, %cst_119 {dimension_numbers = #tpu.dot_dimension_numbers<[1], [0], [0], [1], [0, 0, 1, 1], [], []>} : vector<8x128xbf16>, vector<128x128xbf16>, vector<8x128xf32> -> vector<8x128xf32>
    %c0_120 = arith.constant 0 : index
    %c0_121 = arith.constant 0 : index
    %408 = vector.load %arg14[%c0_120, %c0_121] : memref<1x128xf32, #tpu.memory_space<vmem>>, vector<1x128xf32>
    %409 = vector.broadcast %408 : vector<1x128xf32> to vector<8x128xf32>
    %410 = arith.addf %407, %409 : vector<8x128xf32>
    %c0_122 = arith.constant 0 : index
    %c0_123 = arith.constant 0 : index
    %411 = vector.load %arg15[%c0_122, %c0_123] : memref<8x128xf32, #tpu.memory_space<vmem>>, vector<8x128xf32>
    tpu.vector_store %arg15[%c0_122, %c0_123], %410 {strides = array<i32>} : memref<8x128xf32, #tpu.memory_space<vmem>>, vector<8x128xf32>,
    return
  }
  func.func @transform_0(%arg0: i32) -> (i32, i32) {
    %c0_i32 = arith.constant 0 : i32
    %c0_i32_0 = arith.constant 0 : i32
    return %arg0, %c0_i32 : i32, i32
  }
  func.func @transform_1(%arg0: i32) -> (i32, i32) {
    %c0_i32 = arith.constant 0 : i32
    %c0_i32_0 = arith.constant 0 : i32
    %c0_i32_1 = arith.constant 0 : i32
    return %c0_i32, %c0_i32_0 : i32, i32
  }
  func.func @transform_2(%arg0: i32) -> (i32, i32) {
    %c0_i32 = arith.constant 0 : i32
    %c0_i32_0 = arith.constant 0 : i32
    %c0_i32_1 = arith.constant 0 : i32
    return %c0_i32, %c0_i32_0 : i32, i32
  }
  func.func @transform_3(%arg0: i32) -> (i32, i32) {
    %c0_i32 = arith.constant 0 : i32
    %c0_i32_0 = arith.constant 0 : i32
    %c0_i32_1 = arith.constant 0 : i32
    return %c0_i32, %c0_i32_0 : i32, i32
  }
  func.func @transform_4(%arg0: i32) -> (i32, i32) {
    %c0_i32 = arith.constant 0 : i32
    %c0_i32_0 = arith.constant 0 : i32
    %c0_i32_1 = arith.constant 0 : i32
    return %c0_i32, %c0_i32_0 : i32, i32
  }
  func.func @transform_5(%arg0: i32) -> (i32, i32) {
    %c0_i32 = arith.constant 0 : i32
    %c0_i32_0 = arith.constant 0 : i32
    %c0_i32_1 = arith.constant 0 : i32
    return %c0_i32, %c0_i32_0 : i32, i32
  }
  func.func @transform_6(%arg0: i32) -> (i32, i32) {
    %c0_i32 = arith.constant 0 : i32
    %c0_i32_0 = arith.constant 0 : i32
    %c0_i32_1 = arith.constant 0 : i32
    return %c0_i32, %c0_i32_0 : i32, i32
  }
  func.func @transform_7(%arg0: i32) -> (i32, i32) {
    %c0_i32 = arith.constant 0 : i32
    %c0_i32_0 = arith.constant 0 : i32
    %c0_i32_1 = arith.constant 0 : i32
    return %c0_i32, %c0_i32_0 : i32, i32
  }
  func.func @transform_8(%arg0: i32) -> (i32, i32) {
    %c0_i32 = arith.constant 0 : i32
    %c0_i32_0 = arith.constant 0 : i32
    %c0_i32_1 = arith.constant 0 : i32
    return %c0_i32, %c0_i32_0 : i32, i32
  }
  func.func @transform_9(%arg0: i32) -> (i32, i32) {
    %c0_i32 = arith.constant 0 : i32
    %c0_i32_0 = arith.constant 0 : i32
    %c0_i32_1 = arith.constant 0 : i32
    return %c0_i32, %c0_i32_0 : i32, i32
  }
  func.func @transform_10(%arg0: i32) -> (i32, i32) {
    %c0_i32 = arith.constant 0 : i32
    %c0_i32_0 = arith.constant 0 : i32
    %c0_i32_1 = arith.constant 0 : i32
    return %c0_i32, %c0_i32_0 : i32, i32
  }
  func.func @transform_11(%arg0: i32) -> (i32, i32) {
    %c0_i32 = arith.constant 0 : i32
    %c0_i32_0 = arith.constant 0 : i32
    %c0_i32_1 = arith.constant 0 : i32
    return %c0_i32, %c0_i32_0 : i32, i32
  }
  func.func @transform_12(%arg0: i32) -> (i32, i32) {
    %c0_i32 = arith.constant 0 : i32
    %c0_i32_0 = arith.constant 0 : i32
    %c0_i32_1 = arith.constant 0 : i32
    return %c0_i32, %c0_i32_0 : i32, i32
  }
  func.func @transform_13(%arg0: i32) -> (i32, i32) {
    %c0_i32 = arith.constant 0 : i32
    %c0_i32_0 = arith.constant 0 : i32
    %c0_i32_1 = arith.constant 0 : i32
    return %c0_i32, %c0_i32_0 : i32, i32
  }
  func.func @transform_14(%arg0: i32) -> (i32, i32) {
    %c0_i32 = arith.constant 0 : i32
    %c0_i32_0 = arith.constant 0 : i32
    return %arg0, %c0_i32 : i32, i32
  }
}

</mosaic_0001>

<llo_original>
// kernel: lstm_model_forward.1
$region0: #{lstm_model_forward.1}
  #allocation0 [shape = 'u32[]', space=smem, size = 0x4, offset = 0x4, fixed_abs, tag = 'smem constant byte address 0x4 - core index']
  #allocation1 [shape = 'u32[144,128]{1,0:T(1,128)}', space=vmem, size = 0x12000, scoped, tag = 'internal scratch']
  #allocation2 [shape = 'f32[40,64]{1,0:T(8,128)}', space=vmem, size = 0x5000, scoped, tag = 'scratch operand']
  #allocation3 [shape = 'f32[40,32]{1,0:T(8,128)}', space=vmem, size = 0x5000, scoped, tag = 'scratch operand']
  %s0 = inlined_call_operand.vmem [shape: f32[40,15], index: 0, kind: input, shape index: {}]
  %s1 = inlined_call_operand.hbm [shape: bf16[15,256], index: 1, kind: input, shape index: {}]
  %s2 = inlined_call_operand.vmem [shape: bf16[64,256], index: 2, kind: input, shape index: {}]
  %s3 = inlined_call_operand.hbm [shape: f32[1,256], index: 3, kind: input, shape index: {}]
  %s4 = inlined_call_operand.hbm [shape: bf16[64,128], index: 4, kind: input, shape index: {}]
  %s5 = inlined_call_operand.vmem [shape: bf16[32,128], index: 5, kind: input, shape index: {}]
  %s6 = inlined_call_operand.vmem [shape: f32[1,128], index: 6, kind: input, shape index: {}]
  %s7 = inlined_call_operand.hbm [shape: bf16[32,64], index: 7, kind: input, shape index: {}]
  %s8 = inlined_call_operand.vmem [shape: bf16[16,64], index: 8, kind: input, shape index: {}]
  %s9 = inlined_call_operand.vmem [shape: f32[1,64], index: 9, kind: input, shape index: {}]
  %s10 = inlined_call_operand.hbm [shape: bf16[80,128], index: 10, kind: input, shape index: {}]
  %s11 = inlined_call_operand.hbm [shape: f32[1,128], index: 11, kind: input, shape index: {}]
  %s12 = inlined_call_operand.hbm [shape: bf16[128,128], index: 12, kind: input, shape index: {}]
  %s13 = inlined_call_operand.hbm [shape: f32[1,128], index: 13, kind: input, shape index: {}]
  %s14 = inlined_call_operand.vmem [shape: f32[8,128], index: 14, kind: output, shape index: {}]
  %s15 = sld [smem:[#allocation0]]
  $region98: #{lstm_model_forward.1} parent=0
    _
  %s17 = ssub.s32 1, %s15
  %s18 = scalar_select 0, %s17, %s15
  $region1: #{lstm_model_forward.1} parent=0
    #allocation4 [shape = 'u8[8192]{0}', space=vmem, size = 0x2000, scoped, tag = 'input window, operand 1, single buffered']
    #allocation5 [shape = 's32[1]{0}', space=sflag, size = 0x4, scoped, tag = 'scoped memory for lstm_model_forward.1']
    #allocation6 [shape = 'u8[1024]{0}', space=vmem, size = 0x400, scoped, tag = 'input window, operand 3, single buffered']
    #allocation7 [shape = 's32[1]{0}', space=sflag, size = 0x4, scoped, tag = 'scoped memory for lstm_model_forward.1']
    #allocation8 [shape = 'u8[16384]{0}', space=vmem, size = 0x4000, scoped, tag = 'input window, operand 4, single buffered']
    #allocation9 [shape = 'u8[8192]{0}', space=vmem, size = 0x2000, scoped, tag = 'input window, operand 7, single buffered']
    #allocation10 [shape = 's32[1]{0}', space=sflag, size = 0x4, scoped, tag = 'scoped memory for lstm_model_forward.1']
    #allocation11 [shape = 'u8[20480]{0}', space=vmem, size = 0x5000, scoped, tag = 'input window, operand 10, single buffered']
    #allocation12 [shape = 'u8[512]{0}', space=vmem, size = 0x400, scoped, tag = 'input window, operand 11, single buffered']
    #allocation13 [shape = 's32[1]{0}', space=sflag, size = 0x4, scoped, tag = 'scoped memory for lstm_model_forward.1']
    #allocation14 [shape = 'u8[32768]{0}', space=vmem, size = 0x8000, scoped, tag = 'input window, operand 12, single buffered']
    #allocation15 [shape = 'u8[512]{0}', space=vmem, size = 0x400, scoped, tag = 'input window, operand 13, single buffered']
    #allocation16 [shape = 's32[1]{0}', space=sflag, size = 0x4, scoped, tag = 'scoped memory for lstm_model_forward.1']
    %19 = vsyncpa [#allocation5], 0
    %20 = vsyncpa [#allocation7], 0
    %21 = vsyncpa [#allocation10], 0
    %22 = vsyncpa [#allocation13], 0
    %23 = vsyncpa [#allocation16], 0
    // Predicated region
    $region2: #{lstm_model_forward.1} parent=1 // pred_check
      _
    $region3: #{lstm_model_forward.1} parent=1 // pred_check_branch
      %25 = sbr.rel (0) target = $region5
    $region4: #{lstm_model_forward.1} parent=1 // pred_region
      _
    $region5: #{lstm_model_forward.1} parent=1 // pred_fallthru
      _
    // Predicated region
    $region6: #{lstm_model_forward.1} parent=1 // pred_check
      _
    $region7: #{lstm_model_forward.1} parent=1 // pred_check_branch
      %27 = sbr.rel (0) target = $region9
    $region8: #{lstm_model_forward.1} parent=1 // pred_region
      %s29 = ssub.s32 256, 256
      %30 = vsyncadd [#allocation5], %s29
      %s31 = sshll.u32 [#allocation4], 4
      %s32 = int_to_ptr.vmem [resolvable:$true] %s31
      %37 = dma.hbm_to_vmem [thread:$0]  %s1, 256, %s32, [#allocation5], 128, 128, 8
    $region9: #{lstm_model_forward.1} parent=1 // pred_fallthru
      _
    // Predicated region
    $region10: #{lstm_model_forward.1} parent=1 // pred_check
      _
    $region11: #{lstm_model_forward.1} parent=1 // pred_check_branch
      %39 = sbr.rel (0) target = $region13
    $region12: #{lstm_model_forward.1} parent=1 // pred_region
      _
    $region13: #{lstm_model_forward.1} parent=1 // pred_fallthru
      _
    // Predicated region
    $region14: #{lstm_model_forward.1} parent=1 // pred_check
      _
    $region15: #{lstm_model_forward.1} parent=1 // pred_check_branch
      %41 = sbr.rel (0) target = $region17
    $region16: #{lstm_model_forward.1} parent=1 // pred_region
      %s43 = ssub.s32 32, 32
      %44 = vsyncadd [#allocation7], %s43
      %s46 = sshll.u32 [#allocation6], 4
      %s47 = int_to_ptr.vmem [resolvable:$true] %s46
      %49 = dma.hbm_to_vmem [thread:$0]  %s3, 32, %s47, [#allocation7]
    $region17: #{lstm_model_forward.1} parent=1 // pred_fallthru
      _
    // Predicated region
    $region18: #{lstm_model_forward.1} parent=1 // pred_check
      _
    $region19: #{lstm_model_forward.1} parent=1 // pred_check_branch
      %51 = sbr.rel (0) target = $region21
    $region20: #{lstm_model_forward.1} parent=1 // pred_region
      %s53 = ssub.s32 512, 512
      %54 = vsyncadd [#allocation7], %s53
      %s55 = sshll.u32 [#allocation8], 4
      %s56 = int_to_ptr.vmem [resolvable:$true] %s55
      %61 = dma.hbm_to_vmem [thread:$0]  %s4, 512, %s56, [#allocation7], 64, 64, 4
    $region21: #{lstm_model_forward.1} parent=1 // pred_fallthru
      _
    // Predicated region
    $region22: #{lstm_model_forward.1} parent=1 // pred_check
      _
    $region23: #{lstm_model_forward.1} parent=1 // pred_check_branch
      %63 = sbr.rel (0) target = $region25
    $region24: #{lstm_model_forward.1} parent=1 // pred_region
      _
    $region25: #{lstm_model_forward.1} parent=1 // pred_fallthru
      _
    // Predicated region
    $region26: #{lstm_model_forward.1} parent=1 // pred_check
      _
    $region27: #{lstm_model_forward.1} parent=1 // pred_check_branch
      %65 = sbr.rel (0) target = $region29
    $region28: #{lstm_model_forward.1} parent=1 // pred_region
      _
    $region29: #{lstm_model_forward.1} parent=1 // pred_fallthru
      _
    // Predicated region
    $region30: #{lstm_model_forward.1} parent=1 // pred_check
      _
    $region31: #{lstm_model_forward.1} parent=1 // pred_check_branch
      %67 = sbr.rel (0) target = $region33
    $region32: #{lstm_model_forward.1} parent=1 // pred_region
      %s69 = ssub.s32 256, 256
      %70 = vsyncadd [#allocation10], %s69
      %s71 = sshll.u32 [#allocation9], 4
      %s72 = int_to_ptr.vmem [resolvable:$true] %s71
      %77 = dma.hbm_to_vmem [thread:$0]  %s7, 256, %s72, [#allocation10], 64, 64, 4
    $region33: #{lstm_model_forward.1} parent=1 // pred_fallthru
      _
    // Predicated region
    $region34: #{lstm_model_forward.1} parent=1 // pred_check
      _
    $region35: #{lstm_model_forward.1} parent=1 // pred_check_branch
      %79 = sbr.rel (0) target = $region37
    $region36: #{lstm_model_forward.1} parent=1 // pred_region
      _
    $region37: #{lstm_model_forward.1} parent=1 // pred_fallthru
      _
    // Predicated region
    $region38: #{lstm_model_forward.1} parent=1 // pred_check
      _
    $region39: #{lstm_model_forward.1} parent=1 // pred_check_branch
      %81 = sbr.rel (0) target = $region41
    $region40: #{lstm_model_forward.1} parent=1 // pred_region
      _
    $region41: #{lstm_model_forward.1} parent=1 // pred_fallthru
      _
    // Predicated region
    $region42: #{lstm_model_forward.1} parent=1 // pred_check
      _
    $region43: #{lstm_model_forward.1} parent=1 // pred_check_branch
      %83 = sbr.rel (0) target = $region45
    $region44: #{lstm_model_forward.1} parent=1 // pred_region
      %s85 = ssub.s32 640, 640
      %86 = vsyncadd [#allocation10], %s85
      %s87 = sshll.u32 [#allocation11], 4
      %s88 = int_to_ptr.vmem [resolvable:$true] %s87
      %93 = dma.hbm_to_vmem [thread:$0]  %s10, 640, %s88, [#allocation10], 64, 64, 4
    $region45: #{lstm_model_forward.1} parent=1 // pred_fallthru
      _
    // Predicated region
    $region46: #{lstm_model_forward.1} parent=1 // pred_check
      _
    $region47: #{lstm_model_forward.1} parent=1 // pred_check_branch
      %95 = sbr.rel (0) target = $region49
    $region48: #{lstm_model_forward.1} parent=1 // pred_region
      %s97 = ssub.s32 16, 16
      %98 = vsyncadd [#allocation13], %s97
      %s100 = sshll.u32 [#allocation12], 4
      %s101 = int_to_ptr.vmem [resolvable:$true] %s100
      %103 = dma.hbm_to_vmem [thread:$0]  %s11, 16, %s101, [#allocation13]
    $region49: #{lstm_model_forward.1} parent=1 // pred_fallthru
      _
    // Predicated region
    $region50: #{lstm_model_forward.1} parent=1 // pred_check
      _
    $region51: #{lstm_model_forward.1} parent=1 // pred_check_branch
      %105 = sbr.rel (0) target = $region53
    $region52: #{lstm_model_forward.1} parent=1 // pred_region
      %s107 = ssub.s32 1024, 1024
      %108 = vsyncadd [#allocation13], %s107
      %s109 = sshll.u32 [#allocation14], 4
      %s110 = int_to_ptr.vmem [resolvable:$true] %s109
      %115 = dma.hbm_to_vmem [thread:$0]  %s12, 1024, %s110, [#allocation13], 64, 64, 4
    $region53: #{lstm_model_forward.1} parent=1 // pred_fallthru
      _
    // Predicated region
    $region54: #{lstm_model_forward.1} parent=1 // pred_check
      _
    $region55: #{lstm_model_forward.1} parent=1 // pred_check_branch
      %117 = sbr.rel (0) target = $region57
    $region56: #{lstm_model_forward.1} parent=1 // pred_region
      %s119 = ssub.s32 16, 16
      %120 = vsyncadd [#allocation16], %s119
      %s122 = sshll.u32 [#allocation15], 4
      %s123 = int_to_ptr.vmem [resolvable:$true] %s122
      %125 = dma.hbm_to_vmem [thread:$0]  %s13, 16, %s123, [#allocation16]
    $region57: #{lstm_model_forward.1} parent=1 // pred_fallthru
      _
    // Predicated region
    $region58: #{lstm_model_forward.1} parent=1 // pred_check
      _
    $region59: #{lstm_model_forward.1} parent=1 // pred_check_branch
      %127 = sbr.rel (0) target = $region61
    $region60: #{lstm_model_forward.1} parent=1 // pred_region
      %128 = dma.done [#allocation5], 256
    $region61: #{lstm_model_forward.1} parent=1 // pred_fallthru
      _
    // Predicated region
    $region62: #{lstm_model_forward.1} parent=1 // pred_check
      _
    $region63: #{lstm_model_forward.1} parent=1 // pred_check_branch
      %130 = sbr.rel (0) target = $region65
    $region64: #{lstm_model_forward.1} parent=1 // pred_region
      %131 = dma.done [#allocation7], 32
    $region65: #{lstm_model_forward.1} parent=1 // pred_fallthru
      _
    // Predicated region
    $region66: #{lstm_model_forward.1} parent=1 // pred_check
      _
    $region67: #{lstm_model_forward.1} parent=1 // pred_check_branch
      %133 = sbr.rel (0) target = $region69
    $region68: #{lstm_model_forward.1} parent=1 // pred_region
      %134 = dma.done [#allocation7], 512
    $region69: #{lstm_model_forward.1} parent=1 // pred_fallthru
      _
    // Predicated region
    $region70: #{lstm_model_forward.1} parent=1 // pred_check
      _
    $region71: #{lstm_model_forward.1} parent=1 // pred_check_branch
      %136 = sbr.rel (0) target = $region73
    $region72: #{lstm_model_forward.1} parent=1 // pred_region
      %137 = dma.done [#allocation10], 256
    $region73: #{lstm_model_forward.1} parent=1 // pred_fallthru
      _
    // Predicated region
    $region74: #{lstm_model_forward.1} parent=1 // pred_check
      _
    $region75: #{lstm_model_forward.1} parent=1 // pred_check_branch
      %139 = sbr.rel (0) target = $region77
    $region76: #{lstm_model_forward.1} parent=1 // pred_region
      %140 = dma.done [#allocation10], 640
    $region77: #{lstm_model_forward.1} parent=1 // pred_fallthru
      _
    // Predicated region
    $region78: #{lstm_model_forward.1} parent=1 // pred_check
      _
    $region79: #{lstm_model_forward.1} parent=1 // pred_check_branch
      %142 = sbr.rel (0) target = $region81
    $region80: #{lstm_model_forward.1} parent=1 // pred_region
      %143 = dma.done [#allocation13], 16
    $region81: #{lstm_model_forward.1} parent=1 // pred_fallthru
      _
    // Predicated region
    $region82: #{lstm_model_forward.1} parent=1 // pred_check
      _
    $region83: #{lstm_model_forward.1} parent=1 // pred_check_branch
      %145 = sbr.rel (0) target = $region85
    $region84: #{lstm_model_forward.1} parent=1 // pred_region
      %146 = dma.done [#allocation13], 1024
    $region85: #{lstm_model_forward.1} parent=1 // pred_fallthru
      _
    // Predicated region
    $region86: #{lstm_model_forward.1} parent=1 // pred_check
      _
    $region87: #{lstm_model_forward.1} parent=1 // pred_check_branch
      %148 = sbr.rel (0) target = $region89
    $region88: #{lstm_model_forward.1} parent=1 // pred_region
      %149 = dma.done [#allocation16], 16
    $region89: #{lstm_model_forward.1} parent=1 // pred_fallthru
      _
    %v151 = vld [vmem:[%s0] sm:$0xff]
    %v152 = vld [vmem:[%s0 + $0x8] sm:$0xff]
    %v153 = vld [vmem:[%s0 + $0x10] sm:$0xff]
    %v154 = vld [vmem:[%s0 + $0x18] sm:$0xff]
    %v155 = vld [vmem:[%s0 + $0x20] sm:$0xff]
    %v156 = vld [vmem:[%s2] sm:$0xff]
    %v157 = vld [vmem:[%s2 + $0x8] sm:$0xff]
    %v158 = vld [vmem:[%s2 + $0x10] sm:$0xff]
    %v159 = vld [vmem:[%s2 + $0x18] sm:$0xff]
    %v160 = vld [vmem:[%s2 + $0x20] sm:$0xff]
    %v161 = vld [vmem:[%s2 + $0x28] sm:$0xff]
    %v162 = vld [vmem:[%s2 + $0x30] sm:$0xff]
    %v163 = vld [vmem:[%s2 + $0x38] sm:$0xff]
    %v164 = vpack.c.bf16 %v152, %v151
    %v165 = vpack.c.bf16 %v154, %v153
    %v166 = vpack.c.bf16 %v155, %v155
    %v167 = vld [vmem:[#allocation4] sm:$0xff]
    %v168 = vld [vmem:[#allocation4 + $0x8] sm:$0xff]
    %v169 = vld [vmem:[#allocation6] sm:$0x3]
    %v171 = vlaneseq
    %v172 = vshrl.u32 %v171, 7
    %v173 = vsub.s32 0, %v172
    %v174 = vrot.slane %v169, %v173
    %v175 = vlaneseq
    %v176 = vshrl.u32 %v175, 7
    %v177 = vsub.s32 1, %v176
    %v178 = vrot.slane %v169, %v177
    %v183 = vunpack.c.l.b16 %v167
    %v184 = vunpack.c.h.b16 %v167
    %v185 = vunpack.c.l.b16 %v168
    %v186 = vunpack.c.h.b16 %v168
    %v187 = vpack.c.b16 %v185, %v183
    %v188 = vpack.c.b16 %v186, %v184
    %vm189 = vcmask 121856
    %v191 = vsel %vm189, %v164, 0
    %v194 = vsel %vm189, %v165, 0
    %v197 = vsel %vm189, %v166, 0
    %vm199 = vcmask 1046528
    %vm200 = vcmask 1047552
    %v201 = vsel %vm199, 4294967295, 65535
    %v202 = vsel %vm200, %v201, 0
    %v204 = vand.u32 %v187, %v202
    %v207 = vand.u32 %v188, %v202
    %209 = vmatprep.subr.bf16.mxu0 %v207
    %210 = vmatpush1.bf16.msra.mxu0 %v204
    %211 = vmatprep.subr.bf16.mxu0 0
    %212 = vmatpush1.bf16.msra.mxu0 0
    %213 = vmatprep.subr.bf16.mxu0 0
    %214 = vmatpush1.bf16.msra.mxu0 0
    %215 = vmatprep.subr.bf16.mxu0 0
    %216 = vmatpush1.bf16.msra.mxu0 0
    %217 = vmatprep.subr.bf16.mxu0 0
    %218 = vmatpush1.bf16.msra.mxu0 0
    %219 = vmatprep.subr.bf16.mxu0 0
    %220 = vmatpush1.bf16.msra.mxu0 0
    %221 = vmatprep.subr.bf16.mxu0 0
    %222 = vmatpush1.bf16.msra.mxu0 0
    %223 = vmatprep.subr.bf16.mxu0 0
    %224 = vmatpush1.bf16.msra.mxu0 0
    %225 = vmatprep.subr.bf16.mxu0 0
    %226 = vmatpush1.bf16.msra.mxu0 0
    %227 = vmatprep.subr.bf16.mxu0 0
    %228 = vmatpush1.bf16.msra.mxu0 0
    %229 = vmatprep.subr.bf16.mxu0 0
    %230 = vmatpush1.bf16.msra.mxu0 0
    %231 = vmatprep.subr.bf16.mxu0 0
    %232 = vmatpush1.bf16.msra.mxu0 0
    %233 = vmatprep.subr.bf16.mxu0 0
    %234 = vmatpush1.bf16.msra.mxu0 0
    %235 = vmatprep.subr.bf16.mxu0 0
    %236 = vmatpush1.bf16.msra.mxu0 0
    %237 = vmatprep.subr.bf16.mxu0 0
    %238 = vmatpush1.bf16.msra.mxu0 0
    %239 = vmatprep.subr.bf16.mxu0 0
    %240 = vmatpush1.bf16.msra.mxu0 0
    %241 = vmatprep.mubr.bf16.mxu0 0
    %242 = vmatmul.mubr.bf16.gmra.mrb[0].mxu0 %v191
    %v243 = vpop.f32.mrb[0].mxu0
    %v244 = vadd.f32 %v174, %v243
    %v245 = vpop.f32.mrb[0].mxu0
    %v246 = vadd.f32 %v178, %v245
    %v247 = vpop.f32.mrb[0].mxu0
    %v248 = vadd.f32 %v174, %v247
    %v249 = vpop.f32.mrb[0].mxu0
    %v250 = vadd.f32 %v178, %v249
    %251 = vmatprep.mubr.bf16.mxu0 0
    %252 = vmatmul.mubr.bf16.gmra.mrb[0].mxu0 %v194
    %v253 = vpop.f32.mrb[0].mxu0
    %v254 = vadd.f32 %v174, %v253
    %v255 = vpop.f32.mrb[0].mxu0
    %v256 = vadd.f32 %v178, %v255
    %v257 = vpop.f32.mrb[0].mxu0
    %v258 = vadd.f32 %v174, %v257
    %v259 = vpop.f32.mrb[0].mxu0
    %v260 = vadd.f32 %v178, %v259
    %261 = vmatprep.mubr.bf16.mxu0 0
    %262 = vmatmul.mubr.bf16.gmra.mrb[0].mxu0 %v197
    %v263 = vpop.f32.mrb[0].mxu0
    %v264 = vadd.f32 %v174, %v263
    %v265 = vpop.f32.mrb[0].mxu0
    %v266 = vadd.f32 %v178, %v265
    %v267 = vpop.f32.mrb[0].mxu0
    %v268 = vpop.f32.mrb[0].mxu0
    %269 = vdwg.mxu0
    %v278 = vunpack.c.l.b16 %v156
    %v279 = vunpack.c.h.b16 %v156
    %v280 = vunpack.c.l.b16 %v157
    %v281 = vunpack.c.h.b16 %v157
    %v282 = vunpack.c.l.b16 %v158
    %v283 = vunpack.c.h.b16 %v158
    %v284 = vunpack.c.l.b16 %v159
    %v285 = vunpack.c.h.b16 %v159
    %v286 = vunpack.c.l.b16 %v160
    %v287 = vunpack.c.h.b16 %v160
    %v288 = vunpack.c.l.b16 %v161
    %v289 = vunpack.c.h.b16 %v161
    %v290 = vunpack.c.l.b16 %v162
    %v291 = vunpack.c.h.b16 %v162
    %v292 = vunpack.c.l.b16 %v163
    %v293 = vunpack.c.h.b16 %v163
    %v294 = vpack.c.b16 %v280, %v278
    %v295 = vpack.c.b16 %v281, %v279
    %v296 = vpack.c.b16 %v284, %v282
    %v297 = vpack.c.b16 %v285, %v283
    %v298 = vpack.c.b16 %v288, %v286
    %v299 = vpack.c.b16 %v289, %v287
    %v300 = vpack.c.b16 %v292, %v290
    %v301 = vpack.c.b16 %v293, %v291
    %vm310 = vcmask 523264
    %v312 = vsel %vm310, 0, 0
    %314 = vmatprep.subr.bf16.mxu0 %v295
    %315 = vmatpush1.bf16.msra.mxu0 %v294
    %316 = vmatprep.subr.bf16.mxu0 %v297
    %317 = vmatpush1.bf16.msra.mxu0 %v296
    %318 = vmatprep.subr.bf16.mxu0 %v299
    %319 = vmatpush1.bf16.msra.mxu0 %v298
    %320 = vmatprep.subr.bf16.mxu0 %v301
    %321 = vmatpush1.bf16.msra.mxu0 %v300
    %322 = vmatprep.subr.bf16.mxu0 0
    %323 = vmatpush1.bf16.msra.mxu0 0
    %324 = vmatprep.subr.bf16.mxu0 0
    %325 = vmatpush1.bf16.msra.mxu0 0
    %326 = vmatprep.subr.bf16.mxu0 0
    %327 = vmatpush1.bf16.msra.mxu0 0
    %328 = vmatprep.subr.bf16.mxu0 0
    %329 = vmatpush1.bf16.msra.mxu0 0
    %330 = vmatprep.subr.bf16.mxu0 0
    %331 = vmatpush1.bf16.msra.mxu0 0
    %332 = vmatprep.subr.bf16.mxu0 0
    %333 = vmatpush1.bf16.msra.mxu0 0
    %334 = vmatprep.subr.bf16.mxu0 0
    %335 = vmatpush1.bf16.msra.mxu0 0
    %336 = vmatprep.subr.bf16.mxu0 0
    %337 = vmatpush1.bf16.msra.mxu0 0
    %338 = vmatprep.subr.bf16.mxu0 0
    %339 = vmatpush1.bf16.msra.mxu0 0
    %340 = vmatprep.subr.bf16.mxu0 0
    %341 = vmatpush1.bf16.msra.mxu0 0
    %342 = vmatprep.subr.bf16.mxu0 0
    %343 = vmatpush1.bf16.msra.mxu0 0
    %344 = vmatprep.subr.bf16.mxu0 0
    %345 = vmatpush1.bf16.msra.mxu0 0
    %346 = vmatprep.mubr.bf16.mxu0 0
    %347 = vmatmul.mubr.bf16.gmra.mrb[0].mxu0 %v312
    %v348 = vpop.f32.mrb[0].mxu0
    %v349 = vadd.f32 0.0, %v348
    %v350 = vpop.f32.mrb[0].mxu0
    %v351 = vadd.f32 0.0, %v350
    %v352 = vpop.f32.mrb[0].mxu0
    %v353 = vpop.f32.mrb[0].mxu0
    %354 = vdwg.mxu0
    %v355 = vadd.f32 %v244, %v349
    %v356 = vadd.f32 %v246, %v351
    %v357 = vmul.f32 %v355, 0.5
    %v358 = vmul.f32 %v356, 0.5
    %v359 = vtanh.pop %v357
    %v360 = vtanh.pop %v358
    %v361 = vmul.f32 %v359, 0.5
    %v362 = vmul.f32 %v360, 0.5
    %v363 = vadd.f32 %v361, 0.5
    %v364 = vadd.f32 %v362, 0.5
    %v365 = vtanh.pop %v356
    %v366 = vmul.f32 %v363, 0.0
    %368 = vrot.lane.b32.xlu0 %v365, 64
    %v369 = vpop.permute.xlu0 %368
    %v371 = vmul.f32 %v363, %v369
    %373 = vrot.lane.b32.xlu0 %v371, 64
    %v374 = vpop.permute.xlu0 %373
    %v376 = vadd.f32 %v366, %v374
    %v377 = vtanh.pop %v376
    %379 = vrot.lane.b32.xlu0 %v377, 64
    %v380 = vpop.permute.xlu0 %379
    %v382 = vmul.f32 %v364, %v380
    %v383 = vtanh.pop %v382
    %384 = vst.msk [vmem:[#allocation2] sm:$0xff] %vm310, %v383
    %v385 = vpack.c.bf16 %v382, %v382
    %v387 = vsel %vm310, %v385, 0
    %389 = vmatprep.subr.bf16.mxu0 %v295
    %390 = vmatpush1.bf16.msra.mxu0 %v294
    %391 = vmatprep.subr.bf16.mxu0 %v297
    %392 = vmatpush1.bf16.msra.mxu0 %v296
    %393 = vmatprep.subr.bf16.mxu0 %v299
    %394 = vmatpush1.bf16.msra.mxu0 %v298
    %395 = vmatprep.subr.bf16.mxu0 %v301
    %396 = vmatpush1.bf16.msra.mxu0 %v300
    %397 = vmatprep.subr.bf16.mxu0 0
    %398 = vmatpush1.bf16.msra.mxu0 0
    %399 = vmatprep.subr.bf16.mxu0 0
    %400 = vmatpush1.bf16.msra.mxu0 0
    %401 = vmatprep.subr.bf16.mxu0 0
    %402 = vmatpush1.bf16.msra.mxu0 0
    %403 = vmatprep.subr.bf16.mxu0 0
    %404 = vmatpush1.bf16.msra.mxu0 0
    %405 = vmatprep.subr.bf16.mxu0 0
    %406 = vmatpush1.bf16.msra.mxu0 0
    %407 = vmatprep.subr.bf16.mxu0 0
    %408 = vmatpush1.bf16.msra.mxu0 0
    %409 = vmatprep.subr.bf16.mxu0 0
    %410 = vmatpush1.bf16.msra.mxu0 0
    %411 = vmatprep.subr.bf16.mxu0 0
    %412 = vmatpush1.bf16.msra.mxu0 0
    %413 = vmatprep.subr.bf16.mxu0 0
    %414 = vmatpush1.bf16.msra.mxu0 0
    %415 = vmatprep.subr.bf16.mxu0 0
    %416 = vmatpush1.bf16.msra.mxu0 0
    %417 = vmatprep.subr.bf16.mxu0 0
    %418 = vmatpush1.bf16.msra.mxu0 0
    %419 = vmatprep.subr.bf16.mxu0 0
    %420 = vmatpush1.bf16.msra.mxu0 0
    %421 = vmatprep.mubr.bf16.mxu0 0
    %422 = vmatmul.mubr.bf16.gmra.mrb[0].mxu0 %v387
    %v423 = vpop.f32.mrb[0].mxu0
    %v424 = vadd.f32 0.0, %v423
    %v425 = vpop.f32.mrb[0].mxu0
    %v426 = vadd.f32 0.0, %v425
    %v427 = vpop.f32.mrb[0].mxu0
    %v428 = vpop.f32.mrb[0].mxu0
    %429 = vdwg.mxu0
    %v430 = vadd.f32 %v248, %v424
    %v431 = vadd.f32 %v250, %v426
    %v432 = vmul.f32 %v430, 0.5
    %v433 = vmul.f32 %v431, 0.5
    %v434 = vtanh.pop %v432
    %v435 = vtanh.pop %v433
    %v436 = vmul.f32 %v434, 0.5
    %v437 = vmul.f32 %v435, 0.5
    %v438 = vadd.f32 %v436, 0.5
    %v439 = vadd.f32 %v437, 0.5
    %v440 = vtanh.pop %v431
    %v441 = vmul.f32 %v438, %v376
    %443 = vrot.lane.b32.xlu0 %v440, 64
    %v444 = vpop.permute.xlu0 %443
    %v446 = vmul.f32 %v438, %v444
    %448 = vrot.lane.b32.xlu0 %v446, 64
    %v449 = vpop.permute.xlu0 %448
    %v451 = vadd.f32 %v441, %v449
    %v452 = vtanh.pop %v451
    %454 = vrot.lane.b32.xlu0 %v452, 64
    %v455 = vpop.permute.xlu0 %454
    %v457 = vmul.f32 %v439, %v455
    %v458 = vtanh.pop %v457
    %459 = vst.msk [vmem:[#allocation2 + $0x8] sm:$0xff] %vm310, %v458
    %v460 = vpack.c.bf16 %v457, %v457
    %v462 = vsel %vm310, %v460, 0
    %464 = vmatprep.subr.bf16.mxu0 %v295
    %465 = vmatpush1.bf16.msra.mxu0 %v294
    %466 = vmatprep.subr.bf16.mxu0 %v297
    %467 = vmatpush1.bf16.msra.mxu0 %v296
    %468 = vmatprep.subr.bf16.mxu0 %v299
    %469 = vmatpush1.bf16.msra.mxu0 %v298
    %470 = vmatprep.subr.bf16.mxu0 %v301
    %471 = vmatpush1.bf16.msra.mxu0 %v300
    %472 = vmatprep.subr.bf16.mxu0 0
    %473 = vmatpush1.bf16.msra.mxu0 0
    %474 = vmatprep.subr.bf16.mxu0 0
    %475 = vmatpush1.bf16.msra.mxu0 0
    %476 = vmatprep.subr.bf16.mxu0 0
    %477 = vmatpush1.bf16.msra.mxu0 0
    %478 = vmatprep.subr.bf16.mxu0 0
    %479 = vmatpush1.bf16.msra.mxu0 0
    %480 = vmatprep.subr.bf16.mxu0 0
    %481 = vmatpush1.bf16.msra.mxu0 0
    %482 = vmatprep.subr.bf16.mxu0 0
    %483 = vmatpush1.bf16.msra.mxu0 0
    %484 = vmatprep.subr.bf16.mxu0 0
    %485 = vmatpush1.bf16.msra.mxu0 0
    %486 = vmatprep.subr.bf16.mxu0 0
    %487 = vmatpush1.bf16.msra.mxu0 0
    %488 = vmatprep.subr.bf16.mxu0 0
    %489 = vmatpush1.bf16.msra.mxu0 0
    %490 = vmatprep.subr.bf16.mxu0 0
    %491 = vmatpush1.bf16.msra.mxu0 0
    %492 = vmatprep.subr.bf16.mxu0 0
    %493 = vmatpush1.bf16.msra.mxu0 0
    %494 = vmatprep.subr.bf16.mxu0 0
    %495 = vmatpush1.bf16.msra.mxu0 0
    %496 = vmatprep.mubr.bf16.mxu0 0
    %497 = vmatmul.mubr.bf16.gmra.mrb[0].mxu0 %v462
    %v498 = vpop.f32.mrb[0].mxu0
    %v499 = vadd.f32 0.0, %v498
    %v500 = vpop.f32.mrb[0].mxu0
    %v501 = vadd.f32 0.0, %v500
    %v502 = vpop.f32.mrb[0].mxu0
    %v503 = vpop.f32.mrb[0].mxu0
    %504 = vdwg.mxu0
    %v505 = vadd.f32 %v254, %v499
    %v506 = vadd.f32 %v256, %v501
    %v507 = vmul.f32 %v505, 0.5
    %v508 = vmul.f32 %v506, 0.5
    %v509 = vtanh.pop %v507
    %v510 = vtanh.pop %v508
    %v511 = vmul.f32 %v509, 0.5
    %v512 = vmul.f32 %v510, 0.5
    %v513 = vadd.f32 %v511, 0.5
    %v514 = vadd.f32 %v512, 0.5
    %v515 = vtanh.pop %v506
    %v516 = vmul.f32 %v513, %v451
    %518 = vrot.lane.b32.xlu0 %v515, 64
    %v519 = vpop.permute.xlu0 %518
    %v521 = vmul.f32 %v513, %v519
    %523 = vrot.lane.b32.xlu0 %v521, 64
    %v524 = vpop.permute.xlu0 %523
    %v526 = vadd.f32 %v516, %v524
    %v527 = vtanh.pop %v526
    %529 = vrot.lane.b32.xlu0 %v527, 64
    %v530 = vpop.permute.xlu0 %529
    %v532 = vmul.f32 %v514, %v530
    %v533 = vtanh.pop %v532
    %534 = vst.msk [vmem:[#allocation2 + $0x10] sm:$0xff] %vm310, %v533
    %v535 = vpack.c.bf16 %v532, %v532
    %v537 = vsel %vm310, %v535, 0
    %539 = vmatprep.subr.bf16.mxu0 %v295
    %540 = vmatpush1.bf16.msra.mxu0 %v294
    %541 = vmatprep.subr.bf16.mxu0 %v297
    %542 = vmatpush1.bf16.msra.mxu0 %v296
    %543 = vmatprep.subr.bf16.mxu0 %v299
    %544 = vmatpush1.bf16.msra.mxu0 %v298
    %545 = vmatprep.subr.bf16.mxu0 %v301
    %546 = vmatpush1.bf16.msra.mxu0 %v300
    %547 = vmatprep.subr.bf16.mxu0 0
    %548 = vmatpush1.bf16.msra.mxu0 0
    %549 = vmatprep.subr.bf16.mxu0 0
    %550 = vmatpush1.bf16.msra.mxu0 0
    %551 = vmatprep.subr.bf16.mxu0 0
    %552 = vmatpush1.bf16.msra.mxu0 0
    %553 = vmatprep.subr.bf16.mxu0 0
    %554 = vmatpush1.bf16.msra.mxu0 0
    %555 = vmatprep.subr.bf16.mxu0 0
    %556 = vmatpush1.bf16.msra.mxu0 0
    %557 = vmatprep.subr.bf16.mxu0 0
    %558 = vmatpush1.bf16.msra.mxu0 0
    %559 = vmatprep.subr.bf16.mxu0 0
    %560 = vmatpush1.bf16.msra.mxu0 0
    %561 = vmatprep.subr.bf16.mxu0 0
    %562 = vmatpush1.bf16.msra.mxu0 0
    %563 = vmatprep.subr.bf16.mxu0 0
    %564 = vmatpush1.bf16.msra.mxu0 0
    %565 = vmatprep.subr.bf16.mxu0 0
    %566 = vmatpush1.bf16.msra.mxu0 0
    %567 = vmatprep.subr.bf16.mxu0 0
    %568 = vmatpush1.bf16.msra.mxu0 0
    %569 = vmatprep.subr.bf16.mxu0 0
    %570 = vmatpush1.bf16.msra.mxu0 0
    %571 = vmatprep.mubr.bf16.mxu0 0
    %572 = vmatmul.mubr.bf16.gmra.mrb[0].mxu0 %v537
    %v573 = vpop.f32.mrb[0].mxu0
    %v574 = vadd.f32 0.0, %v573
    %v575 = vpop.f32.mrb[0].mxu0
    %v576 = vadd.f32 0.0, %v575
    %v577 = vpop.f32.mrb[0].mxu0
    %v578 = vpop.f32.mrb[0].mxu0
    %579 = vdwg.mxu0
    %v580 = vadd.f32 %v258, %v574
    %v581 = vadd.f32 %v260, %v576
    %v582 = vmul.f32 %v580, 0.5
    %v583 = vmul.f32 %v581, 0.5
    %v584 = vtanh.pop %v582
    %v585 = vtanh.pop %v583
    %v586 = vmul.f32 %v584, 0.5
    %v587 = vmul.f32 %v585, 0.5
    %v588 = vadd.f32 %v586, 0.5
    %v589 = vadd.f32 %v587, 0.5
    %v590 = vtanh.pop %v581
    %v591 = vmul.f32 %v588, %v526
    %593 = vrot.lane.b32.xlu0 %v590, 64
    %v594 = vpop.permute.xlu0 %593
    %v596 = vmul.f32 %v588, %v594
    %598 = vrot.lane.b32.xlu0 %v596, 64
    %v599 = vpop.permute.xlu0 %598
    %v601 = vadd.f32 %v591, %v599
    %v602 = vtanh.pop %v601
    %604 = vrot.lane.b32.xlu0 %v602, 64
    %v605 = vpop.permute.xlu0 %604
    %v607 = vmul.f32 %v589, %v605
    %v608 = vtanh.pop %v607
    %609 = vst.msk [vmem:[#allocation2 + $0x18] sm:$0xff] %vm310, %v608
    %v610 = vpack.c.bf16 %v607, %v607
    %v612 = vsel %vm310, %v610, 0
    %614 = vmatprep.subr.bf16.mxu0 %v295
    %615 = vmatpush1.bf16.msra.mxu0 %v294
    %616 = vmatprep.subr.bf16.mxu0 %v297
    %617 = vmatpush1.bf16.msra.mxu0 %v296
    %618 = vmatprep.subr.bf16.mxu0 %v299
    %619 = vmatpush1.bf16.msra.mxu0 %v298
    %620 = vmatprep.subr.bf16.mxu0 %v301
    %621 = vmatpush1.bf16.msra.mxu0 %v300
    %622 = vmatprep.subr.bf16.mxu0 0
    %623 = vmatpush1.bf16.msra.mxu0 0
    %624 = vmatprep.subr.bf16.mxu0 0
    %625 = vmatpush1.bf16.msra.mxu0 0
    %626 = vmatprep.subr.bf16.mxu0 0
    %627 = vmatpush1.bf16.msra.mxu0 0
    %628 = vmatprep.subr.bf16.mxu0 0
    %629 = vmatpush1.bf16.msra.mxu0 0
    %630 = vmatprep.subr.bf16.mxu0 0
    %631 = vmatpush1.bf16.msra.mxu0 0
    %632 = vmatprep.subr.bf16.mxu0 0
    %633 = vmatpush1.bf16.msra.mxu0 0
    %634 = vmatprep.subr.bf16.mxu0 0
    %635 = vmatpush1.bf16.msra.mxu0 0
    %636 = vmatprep.subr.bf16.mxu0 0
    %637 = vmatpush1.bf16.msra.mxu0 0
    %638 = vmatprep.subr.bf16.mxu0 0
    %639 = vmatpush1.bf16.msra.mxu0 0
    %640 = vmatprep.subr.bf16.mxu0 0
    %641 = vmatpush1.bf16.msra.mxu0 0
    %642 = vmatprep.subr.bf16.mxu0 0
    %643 = vmatpush1.bf16.msra.mxu0 0
    %644 = vmatprep.subr.bf16.mxu0 0
    %645 = vmatpush1.bf16.msra.mxu0 0
    %646 = vmatprep.mubr.bf16.mxu0 0
    %647 = vmatmul.mubr.bf16.gmra.mrb[0].mxu0 %v612
    %v648 = vpop.f32.mrb[0].mxu0
    %v649 = vadd.f32 0.0, %v648
    %v650 = vpop.f32.mrb[0].mxu0
    %v651 = vadd.f32 0.0, %v650
    %v652 = vpop.f32.mrb[0].mxu0
    %v653 = vpop.f32.mrb[0].mxu0
    %654 = vdwg.mxu0
    %v655 = vadd.f32 %v264, %v649
    %v656 = vadd.f32 %v266, %v651
    %v657 = vmul.f32 %v655, 0.5
    %v658 = vmul.f32 %v656, 0.5
    %v659 = vtanh.pop %v657
    %v660 = vtanh.pop %v658
    %v661 = vmul.f32 %v659, 0.5
    %v662 = vmul.f32 %v660, 0.5
    %v663 = vadd.f32 %v661, 0.5
    %v664 = vadd.f32 %v662, 0.5
    %v665 = vtanh.pop %v656
    %v666 = vmul.f32 %v663, %v601
    %668 = vrot.lane.b32.xlu0 %v665, 64
    %v669 = vpop.permute.xlu0 %668
    %v671 = vmul.f32 %v663, %v669
    %673 = vrot.lane.b32.xlu0 %v671, 64
    %v674 = vpop.permute.xlu0 %673
    %v676 = vadd.f32 %v666, %v674
    %v677 = vtanh.pop %v676
    %679 = vrot.lane.b32.xlu0 %v677, 64
    %v680 = vpop.permute.xlu0 %679
    %v682 = vmul.f32 %v664, %v680
    %v683 = vtanh.pop %v682
    %684 = vst.msk [vmem:[#allocation2 + $0x20] sm:$0xff] %vm310, %v683
    %v685 = vld [vmem:[#allocation2] sm:$0xff]
    %v686 = vld [vmem:[#allocation2 + $0x8] sm:$0xff]
    %v687 = vld [vmem:[#allocation2 + $0x10] sm:$0xff]
    %v688 = vld [vmem:[#allocation2 + $0x18] sm:$0xff]
    %v689 = vld [vmem:[#allocation2 + $0x20] sm:$0xff]
    %v690 = vld [vmem:[%s5] sm:$0xf]
    %v691 = vld [vmem:[%s5 + $0x4] sm:$0xf]
    %v692 = vld [vmem:[%s5 + $0x8] sm:$0xf]
    %v693 = vld [vmem:[%s5 + $0xc] sm:$0xf]
    %v694 = vpack.c.bf16 %v686, %v685
    %v695 = vpack.c.bf16 %v688, %v687
    %v696 = vpack.c.bf16 %v689, %v689
    %v697 = vld [vmem:[#allocation8] sm:$0xf]
    %v698 = vld [vmem:[#allocation8 + $0x4] sm:$0xf]
    %v699 = vld [vmem:[#allocation8 + $0x8] sm:$0xf]
    %v700 = vld [vmem:[#allocation8 + $0xc] sm:$0xf]
    %v701 = vld [vmem:[#allocation8 + $0x10] sm:$0xf]
    %v702 = vld [vmem:[#allocation8 + $0x14] sm:$0xf]
    %v703 = vld [vmem:[#allocation8 + $0x18] sm:$0xf]
    %v704 = vld [vmem:[#allocation8 + $0x1c] sm:$0xf]
    %v705 = vld [vmem:[%s6] sm:$0x1]
    %v707 = vlaneseq
    %v708 = vshrl.u32 %v707, 7
    %v709 = vsub.s32 0, %v708
    %v710 = vrot.slane %v705, %v709
    %v720 = vunpack.c.l.b16 %v697
    %v721 = vunpack.c.l.b16 %v698
    %v722 = vunpack.c.l.b16 %v699
    %v723 = vunpack.c.l.b16 %v700
    %v724 = vunpack.c.l.b16 %v701
    %v725 = vunpack.c.l.b16 %v702
    %v726 = vunpack.c.l.b16 %v703
    %v727 = vunpack.c.l.b16 %v704
    %v728 = vpack.c.b16 %v721, %v720
    %v729 = vpack.c.b16 %v723, %v722
    %v730 = vpack.c.b16 %v725, %v724
    %v731 = vpack.c.b16 %v727, %v726
    %v737 = vsel %vm310, %v694, 0
    %v740 = vsel %vm310, %v695, 0
    %v743 = vsel %vm310, %v696, 0
    %745 = vmatprep.subr.bf16.mxu0 0
    %746 = vmatpush1.bf16.msra.mxu0 %v728
    %747 = vmatprep.subr.bf16.mxu0 0
    %748 = vmatpush1.bf16.msra.mxu0 %v729
    %749 = vmatprep.subr.bf16.mxu0 0
    %750 = vmatpush1.bf16.msra.mxu0 %v730
    %751 = vmatprep.subr.bf16.mxu0 0
    %752 = vmatpush1.bf16.msra.mxu0 %v731
    %753 = vmatprep.subr.bf16.mxu0 0
    %754 = vmatpush1.bf16.msra.mxu0 0
    %755 = vmatprep.subr.bf16.mxu0 0
    %756 = vmatpush1.bf16.msra.mxu0 0
    %757 = vmatprep.subr.bf16.mxu0 0
    %758 = vmatpush1.bf16.msra.mxu0 0
    %759 = vmatprep.subr.bf16.mxu0 0
    %760 = vmatpush1.bf16.msra.mxu0 0
    %761 = vmatprep.subr.bf16.mxu0 0
    %762 = vmatpush1.bf16.msra.mxu0 0
    %763 = vmatprep.subr.bf16.mxu0 0
    %764 = vmatpush1.bf16.msra.mxu0 0
    %765 = vmatprep.subr.bf16.mxu0 0
    %766 = vmatpush1.bf16.msra.mxu0 0
    %767 = vmatprep.subr.bf16.mxu0 0
    %768 = vmatpush1.bf16.msra.mxu0 0
    %769 = vmatprep.subr.bf16.mxu0 0
    %770 = vmatpush1.bf16.msra.mxu0 0
    %771 = vmatprep.subr.bf16.mxu0 0
    %772 = vmatpush1.bf16.msra.mxu0 0
    %773 = vmatprep.subr.bf16.mxu0 0
    %774 = vmatpush1.bf16.msra.mxu0 0
    %775 = vmatprep.subr.bf16.mxu0 0
    %776 = vmatpush1.bf16.msra.mxu0 0
    %777 = vmatprep.mubr.bf16.mxu0 0
    %778 = vmatmul.mubr.bf16.gmra.mrb[0].mxu0 %v737
    %v779 = vpop.f32.mrb[0].mxu0
    %v780 = vadd.f32 %v710, %v779
    %v781 = vpop.f32.mrb[0].mxu0
    %v782 = vpop.f32.mrb[0].mxu0
    %v783 = vadd.f32 %v710, %v782
    %v784 = vpop.f32.mrb[0].mxu0
    %785 = vmatprep.mubr.bf16.mxu0 0
    %786 = vmatmul.mubr.bf16.gmra.mrb[0].mxu0 %v740
    %v787 = vpop.f32.mrb[0].mxu0
    %v788 = vadd.f32 %v710, %v787
    %v789 = vpop.f32.mrb[0].mxu0
    %v790 = vpop.f32.mrb[0].mxu0
    %v791 = vadd.f32 %v710, %v790
    %v792 = vpop.f32.mrb[0].mxu0
    %793 = vmatprep.mubr.bf16.mxu0 0
    %794 = vmatmul.mubr.bf16.gmra.mrb[0].mxu0 %v743
    %v795 = vpop.f32.mrb[0].mxu0
    %v796 = vadd.f32 %v710, %v795
    %v797 = vpop.f32.mrb[0].mxu0
    %v798 = vpop.f32.mrb[0].mxu0
    %v799 = vpop.f32.mrb[0].mxu0
    %800 = vdwg.mxu0
    %v805 = vunpack.c.l.b16 %v690
    %v806 = vunpack.c.l.b16 %v691
    %v807 = vunpack.c.l.b16 %v692
    %v808 = vunpack.c.l.b16 %v693
    %v809 = vpack.c.b16 %v806, %v805
    %v810 = vpack.c.b16 %v808, %v807
    %vm813 = vcmask 261120
    %v814 = vsel %vm813, 0, 0
    %816 = vmatprep.subr.bf16.mxu0 0
    %817 = vmatpush1.bf16.msra.mxu0 %v809
    %818 = vmatprep.subr.bf16.mxu0 0
    %819 = vmatpush1.bf16.msra.mxu0 %v810
    %820 = vmatprep.subr.bf16.mxu0 0
    %821 = vmatpush1.bf16.msra.mxu0 0
    %822 = vmatprep.subr.bf16.mxu0 0
    %823 = vmatpush1.bf16.msra.mxu0 0
    %824 = vmatprep.subr.bf16.mxu0 0
    %825 = vmatpush1.bf16.msra.mxu0 0
    %826 = vmatprep.subr.bf16.mxu0 0
    %827 = vmatpush1.bf16.msra.mxu0 0
    %828 = vmatprep.subr.bf16.mxu0 0
    %829 = vmatpush1.bf16.msra.mxu0 0
    %830 = vmatprep.subr.bf16.mxu0 0
    %831 = vmatpush1.bf16.msra.mxu0 0
    %832 = vmatprep.subr.bf16.mxu0 0
    %833 = vmatpush1.bf16.msra.mxu0 0
    %834 = vmatprep.subr.bf16.mxu0 0
    %835 = vmatpush1.bf16.msra.mxu0 0
    %836 = vmatprep.subr.bf16.mxu0 0
    %837 = vmatpush1.bf16.msra.mxu0 0
    %838 = vmatprep.subr.bf16.mxu0 0
    %839 = vmatpush1.bf16.msra.mxu0 0
    %840 = vmatprep.subr.bf16.mxu0 0
    %841 = vmatpush1.bf16.msra.mxu0 0
    %842 = vmatprep.subr.bf16.mxu0 0
    %843 = vmatpush1.bf16.msra.mxu0 0
    %844 = vmatprep.subr.bf16.mxu0 0
    %845 = vmatpush1.bf16.msra.mxu0 0
    %846 = vmatprep.subr.bf16.mxu0 0
    %847 = vmatpush1.bf16.msra.mxu0 0
    %848 = vmatprep.mubr.bf16.mxu0 0
    %849 = vmatmul.mubr.bf16.gmra.mrb[0].mxu0 %v814
    %v850 = vpop.f32.mrb[0].mxu0
    %v851 = vadd.f32 0.0, %v850
    %v852 = vpop.f32.mrb[0].mxu0
    %v853 = vpop.f32.mrb[0].mxu0
    %v854 = vpop.f32.mrb[0].mxu0
    %855 = vdwg.mxu0
    %v856 = vadd.f32 %v780, %v851
    %v857 = vmul.f32 %v856, 0.5
    %v858 = vtanh.pop %v857
    %v859 = vmul.f32 %v858, 0.5
    %v860 = vadd.f32 %v859, 0.5
    %v861 = vtanh.pop %v856
    %v862 = vmul.f32 %v860, 0.0
    %864 = vrot.lane.b32.xlu0 %v861, 32
    %v865 = vpop.permute.xlu0 %864
    %v867 = vmul.f32 %v860, %v865
    %869 = vrot.lane.b32.xlu0 %v867, 32
    %v870 = vpop.permute.xlu0 %869
    %v872 = vadd.f32 %v862, %v870
    %v873 = vtanh.pop %v872
    %875 = vrot.lane.b32.xlu0 %v873, 32
    %v876 = vpop.permute.xlu0 %875
    %v878 = vmul.f32 %v860, %v876
    %v879 = vtanh.pop %v878
    %881 = vrot.lane.b32.xlu0 %v879, 64
    %v882 = vpop.permute.xlu0 %881
    %884 = vst.msk [vmem:[#allocation3] sm:$0xff] %vm813, %v882
    %v885 = vpack.c.bf16 %v878, %v878
    %887 = vrot.lane.b32.xlu0 %v885, 64
    %v888 = vpop.permute.xlu0 %887
    %v890 = vsel %vm813, %v888, 0
    %892 = vmatprep.subr.bf16.mxu0 0
    %893 = vmatpush1.bf16.msra.mxu0 %v809
    %894 = vmatprep.subr.bf16.mxu0 0
    %895 = vmatpush1.bf16.msra.mxu0 %v810
    %896 = vmatprep.subr.bf16.mxu0 0
    %897 = vmatpush1.bf16.msra.mxu0 0
    %898 = vmatprep.subr.bf16.mxu0 0
    %899 = vmatpush1.bf16.msra.mxu0 0
    %900 = vmatprep.subr.bf16.mxu0 0
    %901 = vmatpush1.bf16.msra.mxu0 0
    %902 = vmatprep.subr.bf16.mxu0 0
    %903 = vmatpush1.bf16.msra.mxu0 0
    %904 = vmatprep.subr.bf16.mxu0 0
    %905 = vmatpush1.bf16.msra.mxu0 0
    %906 = vmatprep.subr.bf16.mxu0 0
    %907 = vmatpush1.bf16.msra.mxu0 0
    %908 = vmatprep.subr.bf16.mxu0 0
    %909 = vmatpush1.bf16.msra.mxu0 0
    %910 = vmatprep.subr.bf16.mxu0 0
    %911 = vmatpush1.bf16.msra.mxu0 0
    %912 = vmatprep.subr.bf16.mxu0 0
    %913 = vmatpush1.bf16.msra.mxu0 0
    %914 = vmatprep.subr.bf16.mxu0 0
    %915 = vmatpush1.bf16.msra.mxu0 0
    %916 = vmatprep.subr.bf16.mxu0 0
    %917 = vmatpush1.bf16.msra.mxu0 0
    %918 = vmatprep.subr.bf16.mxu0 0
    %919 = vmatpush1.bf16.msra.mxu0 0
    %920 = vmatprep.subr.bf16.mxu0 0
    %921 = vmatpush1.bf16.msra.mxu0 0
    %922 = vmatprep.subr.bf16.mxu0 0
    %923 = vmatpush1.bf16.msra.mxu0 0
    %924 = vmatprep.mubr.bf16.mxu0 0
    %925 = vmatmul.mubr.bf16.gmra.mrb[0].mxu0 %v890
    %v926 = vpop.f32.mrb[0].mxu0
    %v927 = vadd.f32 0.0, %v926
    %v928 = vpop.f32.mrb[0].mxu0
    %v929 = vpop.f32.mrb[0].mxu0
    %v930 = vpop.f32.mrb[0].mxu0
    %931 = vdwg.mxu0
    %v932 = vadd.f32 %v783, %v927
    %v933 = vmul.f32 %v932, 0.5
    %v934 = vtanh.pop %v933
    %v935 = vmul.f32 %v934, 0.5
    %v936 = vadd.f32 %v935, 0.5
    %v937 = vtanh.pop %v932
    %v938 = vmul.f32 %v936, %v872
    %940 = vrot.lane.b32.xlu0 %v937, 32
    %v941 = vpop.permute.xlu0 %940
    %v943 = vmul.f32 %v936, %v941
    %945 = vrot.lane.b32.xlu0 %v943, 32
    %v946 = vpop.permute.xlu0 %945
    %v948 = vadd.f32 %v938, %v946
    %v949 = vtanh.pop %v948
    %951 = vrot.lane.b32.xlu0 %v949, 32
    %v952 = vpop.permute.xlu0 %951
    %v954 = vmul.f32 %v936, %v952
    %v955 = vtanh.pop %v954
    %957 = vrot.lane.b32.xlu0 %v955, 64
    %v958 = vpop.permute.xlu0 %957
    %960 = vst.msk [vmem:[#allocation3 + $0x8] sm:$0xff] %vm813, %v958
    %v961 = vpack.c.bf16 %v954, %v954
    %963 = vrot.lane.b32.xlu0 %v961, 64
    %v964 = vpop.permute.xlu0 %963
    %v966 = vsel %vm813, %v964, 0
    %968 = vmatprep.subr.bf16.mxu0 0
    %969 = vmatpush1.bf16.msra.mxu0 %v809
    %970 = vmatprep.subr.bf16.mxu0 0
    %971 = vmatpush1.bf16.msra.mxu0 %v810
    %972 = vmatprep.subr.bf16.mxu0 0
    %973 = vmatpush1.bf16.msra.mxu0 0
    %974 = vmatprep.subr.bf16.mxu0 0
    %975 = vmatpush1.bf16.msra.mxu0 0
    %976 = vmatprep.subr.bf16.mxu0 0
    %977 = vmatpush1.bf16.msra.mxu0 0
    %978 = vmatprep.subr.bf16.mxu0 0
    %979 = vmatpush1.bf16.msra.mxu0 0
    %980 = vmatprep.subr.bf16.mxu0 0
    %981 = vmatpush1.bf16.msra.mxu0 0
    %982 = vmatprep.subr.bf16.mxu0 0
    %983 = vmatpush1.bf16.msra.mxu0 0
    %984 = vmatprep.subr.bf16.mxu0 0
    %985 = vmatpush1.bf16.msra.mxu0 0
    %986 = vmatprep.subr.bf16.mxu0 0
    %987 = vmatpush1.bf16.msra.mxu0 0
    %988 = vmatprep.subr.bf16.mxu0 0
    %989 = vmatpush1.bf16.msra.mxu0 0
    %990 = vmatprep.subr.bf16.mxu0 0
    %991 = vmatpush1.bf16.msra.mxu0 0
    %992 = vmatprep.subr.bf16.mxu0 0
    %993 = vmatpush1.bf16.msra.mxu0 0
    %994 = vmatprep.subr.bf16.mxu0 0
    %995 = vmatpush1.bf16.msra.mxu0 0
    %996 = vmatprep.subr.bf16.mxu0 0
    %997 = vmatpush1.bf16.msra.mxu0 0
    %998 = vmatprep.subr.bf16.mxu0 0
    %999 = vmatpush1.bf16.msra.mxu0 0
    %1000 = vmatprep.mubr.bf16.mxu0 0
    %1001 = vmatmul.mubr.bf16.gmra.mrb[0].mxu0 %v966
    %v1002 = vpop.f32.mrb[0].mxu0
    %v1003 = vadd.f32 0.0, %v1002
    %v1004 = vpop.f32.mrb[0].mxu0
    %v1005 = vpop.f32.mrb[0].mxu0
    %v1006 = vpop.f32.mrb[0].mxu0
    %1007 = vdwg.mxu0
    %v1008 = vadd.f32 %v788, %v1003
    %v1009 = vmul.f32 %v1008, 0.5
    %v1010 = vtanh.pop %v1009
    %v1011 = vmul.f32 %v1010, 0.5
    %v1012 = vadd.f32 %v1011, 0.5
    %v1013 = vtanh.pop %v1008
    %v1014 = vmul.f32 %v1012, %v948
    %1016 = vrot.lane.b32.xlu0 %v1013, 32
    %v1017 = vpop.permute.xlu0 %1016
    %v1019 = vmul.f32 %v1012, %v1017
    %1021 = vrot.lane.b32.xlu0 %v1019, 32
    %v1022 = vpop.permute.xlu0 %1021
    %v1024 = vadd.f32 %v1014, %v1022
    %v1025 = vtanh.pop %v1024
    %1027 = vrot.lane.b32.xlu0 %v1025, 32
    %v1028 = vpop.permute.xlu0 %1027
    %v1030 = vmul.f32 %v1012, %v1028
    %v1031 = vtanh.pop %v1030
    %1033 = vrot.lane.b32.xlu0 %v1031, 64
    %v1034 = vpop.permute.xlu0 %1033
    %1036 = vst.msk [vmem:[#allocation3 + $0x10] sm:$0xff] %vm813, %v1034
    %v1037 = vpack.c.bf16 %v1030, %v1030
    %1039 = vrot.lane.b32.xlu0 %v1037, 64
    %v1040 = vpop.permute.xlu0 %1039
    %v1042 = vsel %vm813, %v1040, 0
    %1044 = vmatprep.subr.bf16.mxu0 0
    %1045 = vmatpush1.bf16.msra.mxu0 %v809
    %1046 = vmatprep.subr.bf16.mxu0 0
    %1047 = vmatpush1.bf16.msra.mxu0 %v810
    %1048 = vmatprep.subr.bf16.mxu0 0
    %1049 = vmatpush1.bf16.msra.mxu0 0
    %1050 = vmatprep.subr.bf16.mxu0 0
    %1051 = vmatpush1.bf16.msra.mxu0 0
    %1052 = vmatprep.subr.bf16.mxu0 0
    %1053 = vmatpush1.bf16.msra.mxu0 0
    %1054 = vmatprep.subr.bf16.mxu0 0
    %1055 = vmatpush1.bf16.msra.mxu0 0
    %1056 = vmatprep.subr.bf16.mxu0 0
    %1057 = vmatpush1.bf16.msra.mxu0 0
    %1058 = vmatprep.subr.bf16.mxu0 0
    %1059 = vmatpush1.bf16.msra.mxu0 0
    %1060 = vmatprep.subr.bf16.mxu0 0
    %1061 = vmatpush1.bf16.msra.mxu0 0
    %1062 = vmatprep.subr.bf16.mxu0 0
    %1063 = vmatpush1.bf16.msra.mxu0 0
    %1064 = vmatprep.subr.bf16.mxu0 0
    %1065 = vmatpush1.bf16.msra.mxu0 0
    %1066 = vmatprep.subr.bf16.mxu0 0
    %1067 = vmatpush1.bf16.msra.mxu0 0
    %1068 = vmatprep.subr.bf16.mxu0 0
    %1069 = vmatpush1.bf16.msra.mxu0 0
    %1070 = vmatprep.subr.bf16.mxu0 0
    %1071 = vmatpush1.bf16.msra.mxu0 0
    %1072 = vmatprep.subr.bf16.mxu0 0
    %1073 = vmatpush1.bf16.msra.mxu0 0
    %1074 = vmatprep.subr.bf16.mxu0 0
    %1075 = vmatpush1.bf16.msra.mxu0 0
    %1076 = vmatprep.mubr.bf16.mxu0 0
    %1077 = vmatmul.mubr.bf16.gmra.mrb[0].mxu0 %v1042
    %v1078 = vpop.f32.mrb[0].mxu0
    %v1079 = vadd.f32 0.0, %v1078
    %v1080 = vpop.f32.mrb[0].mxu0
    %v1081 = vpop.f32.mrb[0].mxu0
    %v1082 = vpop.f32.mrb[0].mxu0
    %1083 = vdwg.mxu0
    %v1084 = vadd.f32 %v791, %v1079
    %v1085 = vmul.f32 %v1084, 0.5
    %v1086 = vtanh.pop %v1085
    %v1087 = vmul.f32 %v1086, 0.5
    %v1088 = vadd.f32 %v1087, 0.5
    %v1089 = vtanh.pop %v1084
    %v1090 = vmul.f32 %v1088, %v1024
    %1092 = vrot.lane.b32.xlu0 %v1089, 32
    %v1093 = vpop.permute.xlu0 %1092
    %v1095 = vmul.f32 %v1088, %v1093
    %1097 = vrot.lane.b32.xlu0 %v1095, 32
    %v1098 = vpop.permute.xlu0 %1097
    %v1100 = vadd.f32 %v1090, %v1098
    %v1101 = vtanh.pop %v1100
    %1103 = vrot.lane.b32.xlu0 %v1101, 32
    %v1104 = vpop.permute.xlu0 %1103
    %v1106 = vmul.f32 %v1088, %v1104
    %v1107 = vtanh.pop %v1106
    %1109 = vrot.lane.b32.xlu0 %v1107, 64
    %v1110 = vpop.permute.xlu0 %1109
    %1112 = vst.msk [vmem:[#allocation3 + $0x18] sm:$0xff] %vm813, %v1110
    %v1113 = vpack.c.bf16 %v1106, %v1106
    %1115 = vrot.lane.b32.xlu0 %v1113, 64
    %v1116 = vpop.permute.xlu0 %1115
    %v1118 = vsel %vm813, %v1116, 0
    %1120 = vmatprep.subr.bf16.mxu0 0
    %1121 = vmatpush1.bf16.msra.mxu0 %v809
    %1122 = vmatprep.subr.bf16.mxu0 0
    %1123 = vmatpush1.bf16.msra.mxu0 %v810
    %1124 = vmatprep.subr.bf16.mxu0 0
    %1125 = vmatpush1.bf16.msra.mxu0 0
    %1126 = vmatprep.subr.bf16.mxu0 0
    %1127 = vmatpush1.bf16.msra.mxu0 0
    %1128 = vmatprep.subr.bf16.mxu0 0
    %1129 = vmatpush1.bf16.msra.mxu0 0
    %1130 = vmatprep.subr.bf16.mxu0 0
    %1131 = vmatpush1.bf16.msra.mxu0 0
    %1132 = vmatprep.subr.bf16.mxu0 0
    %1133 = vmatpush1.bf16.msra.mxu0 0
    %1134 = vmatprep.subr.bf16.mxu0 0
    %1135 = vmatpush1.bf16.msra.mxu0 0
    %1136 = vmatprep.subr.bf16.mxu0 0
    %1137 = vmatpush1.bf16.msra.mxu0 0
    %1138 = vmatprep.subr.bf16.mxu0 0
    %1139 = vmatpush1.bf16.msra.mxu0 0
    %1140 = vmatprep.subr.bf16.mxu0 0
    %1141 = vmatpush1.bf16.msra.mxu0 0
    %1142 = vmatprep.subr.bf16.mxu0 0
    %1143 = vmatpush1.bf16.msra.mxu0 0
    %1144 = vmatprep.subr.bf16.mxu0 0
    %1145 = vmatpush1.bf16.msra.mxu0 0
    %1146 = vmatprep.subr.bf16.mxu0 0
    %1147 = vmatpush1.bf16.msra.mxu0 0
    %1148 = vmatprep.subr.bf16.mxu0 0
    %1149 = vmatpush1.bf16.msra.mxu0 0
    %1150 = vmatprep.subr.bf16.mxu0 0
    %1151 = vmatpush1.bf16.msra.mxu0 0
    %1152 = vmatprep.mubr.bf16.mxu0 0
    %1153 = vmatmul.mubr.bf16.gmra.mrb[0].mxu0 %v1118
    %v1154 = vpop.f32.mrb[0].mxu0
    %v1155 = vadd.f32 0.0, %v1154
    %v1156 = vpop.f32.mrb[0].mxu0
    %v1157 = vpop.f32.mrb[0].mxu0
    %v1158 = vpop.f32.mrb[0].mxu0
    %1159 = vdwg.mxu0
    %v1160 = vadd.f32 %v796, %v1155
    %v1161 = vmul.f32 %v1160, 0.5
    %v1162 = vtanh.pop %v1161
    %v1163 = vmul.f32 %v1162, 0.5
    %v1164 = vadd.f32 %v1163, 0.5
    %v1165 = vtanh.pop %v1160
    %v1166 = vmul.f32 %v1164, %v1100
    %1168 = vrot.lane.b32.xlu0 %v1165, 32
    %v1169 = vpop.permute.xlu0 %1168
    %v1171 = vmul.f32 %v1164, %v1169
    %1173 = vrot.lane.b32.xlu0 %v1171, 32
    %v1174 = vpop.permute.xlu0 %1173
    %v1176 = vadd.f32 %v1166, %v1174
    %v1177 = vtanh.pop %v1176
    %1179 = vrot.lane.b32.xlu0 %v1177, 32
    %v1180 = vpop.permute.xlu0 %1179
    %v1182 = vmul.f32 %v1164, %v1180
    %v1183 = vtanh.pop %v1182
    %1185 = vrot.lane.b32.xlu0 %v1183, 64
    %v1186 = vpop.permute.xlu0 %1185
    %1188 = vst.msk [vmem:[#allocation3 + $0x20] sm:$0xff] %vm813, %v1186
    %v1189 = vld [vmem:[#allocation3] sm:$0xff]
    %v1190 = vld [vmem:[#allocation3 + $0x8] sm:$0xff]
    %v1191 = vld [vmem:[#allocation3 + $0x10] sm:$0xff]
    %v1192 = vld [vmem:[#allocation3 + $0x18] sm:$0xff]
    %v1193 = vld [vmem:[#allocation3 + $0x20] sm:$0xff]
    %v1194 = vld [vmem:[%s8] sm:$0xf]
    %v1195 = vld [vmem:[%s8 + $0x4] sm:$0xf]
    %v1196 = vpack.c.bf16 %v1190, %v1189
    %v1197 = vpack.c.bf16 %v1192, %v1191
    %v1198 = vpack.c.bf16 %v1193, %v1193
    %v1199 = vld [vmem:[#allocation9] sm:$0xf]
    %v1200 = vld [vmem:[#allocation9 + $0x4] sm:$0xf]
    %v1201 = vld [vmem:[#allocation9 + $0x8] sm:$0xf]
    %v1202 = vld [vmem:[#allocation9 + $0xc] sm:$0xf]
    %v1203 = vld [vmem:[%s9] sm:$0x1]
    %v1205 = vlaneseq
    %v1206 = vshrl.u32 %v1205, 7
    %v1207 = vsub.s32 0, %v1206
    %v1208 = vrot.slane %v1203, %v1207
    %v1214 = vunpack.c.l.b16 %v1199
    %v1215 = vunpack.c.l.b16 %v1200
    %v1216 = vunpack.c.l.b16 %v1201
    %v1217 = vunpack.c.l.b16 %v1202
    %v1218 = vpack.c.b16 %v1215, %v1214
    %v1219 = vpack.c.b16 %v1217, %v1216
    %v1223 = vsel %vm813, %v1196, 0
    %v1226 = vsel %vm813, %v1197, 0
    %v1229 = vsel %vm813, %v1198, 0
    %1231 = vmatprep.subr.bf16.mxu0 0
    %1232 = vmatpush1.bf16.msra.mxu0 %v1218
    %1233 = vmatprep.subr.bf16.mxu0 0
    %1234 = vmatpush1.bf16.msra.mxu0 %v1219
    %1235 = vmatprep.subr.bf16.mxu0 0
    %1236 = vmatpush1.bf16.msra.mxu0 0
    %1237 = vmatprep.subr.bf16.mxu0 0
    %1238 = vmatpush1.bf16.msra.mxu0 0
    %1239 = vmatprep.subr.bf16.mxu0 0
    %1240 = vmatpush1.bf16.msra.mxu0 0
    %1241 = vmatprep.subr.bf16.mxu0 0
    %1242 = vmatpush1.bf16.msra.mxu0 0
    %1243 = vmatprep.subr.bf16.mxu0 0
    %1244 = vmatpush1.bf16.msra.mxu0 0
    %1245 = vmatprep.subr.bf16.mxu0 0
    %1246 = vmatpush1.bf16.msra.mxu0 0
    %1247 = vmatprep.subr.bf16.mxu0 0
    %1248 = vmatpush1.bf16.msra.mxu0 0
    %1249 = vmatprep.subr.bf16.mxu0 0
    %1250 = vmatpush1.bf16.msra.mxu0 0
    %1251 = vmatprep.subr.bf16.mxu0 0
    %1252 = vmatpush1.bf16.msra.mxu0 0
    %1253 = vmatprep.subr.bf16.mxu0 0
    %1254 = vmatpush1.bf16.msra.mxu0 0
    %1255 = vmatprep.subr.bf16.mxu0 0
    %1256 = vmatpush1.bf16.msra.mxu0 0
    %1257 = vmatprep.subr.bf16.mxu0 0
    %1258 = vmatpush1.bf16.msra.mxu0 0
    %1259 = vmatprep.subr.bf16.mxu0 0
    %1260 = vmatpush1.bf16.msra.mxu0 0
    %1261 = vmatprep.subr.bf16.mxu0 0
    %1262 = vmatpush1.bf16.msra.mxu0 0
    %1263 = vmatprep.mubr.bf16.mxu0 0
    %1264 = vmatmul.mubr.bf16.gmra.mrb[0].mxu0 %v1223
    %v1265 = vpop.f32.mrb[0].mxu0
    %v1266 = vadd.f32 %v1208, %v1265
    %v1267 = vpop.f32.mrb[0].mxu0
    %v1268 = vpop.f32.mrb[0].mxu0
    %v1269 = vadd.f32 %v1208, %v1268
    %v1270 = vpop.f32.mrb[0].mxu0
    %1271 = vmatprep.mubr.bf16.mxu0 0
    %1272 = vmatmul.mubr.bf16.gmra.mrb[0].mxu0 %v1226
    %v1273 = vpop.f32.mrb[0].mxu0
    %v1274 = vadd.f32 %v1208, %v1273
    %v1275 = vpop.f32.mrb[0].mxu0
    %v1276 = vpop.f32.mrb[0].mxu0
    %v1277 = vadd.f32 %v1208, %v1276
    %v1278 = vpop.f32.mrb[0].mxu0
    %1279 = vmatprep.mubr.bf16.mxu0 0
    %1280 = vmatmul.mubr.bf16.gmra.mrb[0].mxu0 %v1229
    %v1281 = vpop.f32.mrb[0].mxu0
    %v1282 = vadd.f32 %v1208, %v1281
    %v1283 = vpop.f32.mrb[0].mxu0
    %v1284 = vpop.f32.mrb[0].mxu0
    %v1285 = vpop.f32.mrb[0].mxu0
    %1286 = vdwg.mxu0
    %v1289 = vunpack.c.l.b16 %v1194
    %v1290 = vunpack.c.l.b16 %v1195
    %v1291 = vpack.c.b16 %v1290, %v1289
    %vm1293 = vcmask 130048
    %v1294 = vsel %vm1293, 0, 0
    %1296 = vmatprep.subr.bf16.mxu0 0
    %1297 = vmatpush1.bf16.msra.mxu0 %v1291
    %1298 = vmatprep.subr.bf16.mxu0 0
    %1299 = vmatpush1.bf16.msra.mxu0 0
    %1300 = vmatprep.subr.bf16.mxu0 0
    %1301 = vmatpush1.bf16.msra.mxu0 0
    %1302 = vmatprep.subr.bf16.mxu0 0
    %1303 = vmatpush1.bf16.msra.mxu0 0
    %1304 = vmatprep.subr.bf16.mxu0 0
    %1305 = vmatpush1.bf16.msra.mxu0 0
    %1306 = vmatprep.subr.bf16.mxu0 0
    %1307 = vmatpush1.bf16.msra.mxu0 0
    %1308 = vmatprep.subr.bf16.mxu0 0
    %1309 = vmatpush1.bf16.msra.mxu0 0
    %1310 = vmatprep.subr.bf16.mxu0 0
    %1311 = vmatpush1.bf16.msra.mxu0 0
    %1312 = vmatprep.subr.bf16.mxu0 0
    %1313 = vmatpush1.bf16.msra.mxu0 0
    %1314 = vmatprep.subr.bf16.mxu0 0
    %1315 = vmatpush1.bf16.msra.mxu0 0
    %1316 = vmatprep.subr.bf16.mxu0 0
    %1317 = vmatpush1.bf16.msra.mxu0 0
    %1318 = vmatprep.subr.bf16.mxu0 0
    %1319 = vmatpush1.bf16.msra.mxu0 0
    %1320 = vmatprep.subr.bf16.mxu0 0
    %1321 = vmatpush1.bf16.msra.mxu0 0
    %1322 = vmatprep.subr.bf16.mxu0 0
    %1323 = vmatpush1.bf16.msra.mxu0 0
    %1324 = vmatprep.subr.bf16.mxu0 0
    %1325 = vmatpush1.bf16.msra.mxu0 0
    %1326 = vmatprep.subr.bf16.mxu0 0
    %1327 = vmatpush1.bf16.msra.mxu0 0
    %1328 = vmatprep.mubr.bf16.mxu0 0
    %1329 = vmatmul.mubr.bf16.gmra.mrb[0].mxu0 %v1294
    %v1330 = vpop.f32.mrb[0].mxu0
    %v1331 = vadd.f32 0.0, %v1330
    %v1332 = vpop.f32.mrb[0].mxu0
    %v1333 = vpop.f32.mrb[0].mxu0
    %v1334 = vpop.f32.mrb[0].mxu0
    %1335 = vdwg.mxu0
    %v1336 = vadd.f32 %v1266, %v1331
    %v1337 = vmul.f32 %v1336, 0.5
    %v1338 = vtanh.pop %v1337
    %v1339 = vmul.f32 %v1338, 0.5
    %v1340 = vadd.f32 %v1339, 0.5
    %v1341 = vtanh.pop %v1336
    %v1342 = vmul.f32 %v1340, 0.0
    %1344 = vrot.lane.b32.xlu0 %v1341, 80
    %v1345 = vpop.permute.xlu0 %1344
    %v1347 = vmul.f32 %v1340, %v1345
    %1349 = vrot.lane.b32.xlu0 %v1347, 16
    %v1350 = vpop.permute.xlu0 %1349
    %v1352 = vadd.f32 %v1342, %v1350
    %v1353 = vtanh.pop %v1352
    %1355 = vrot.lane.b32.xlu0 %v1353, 16
    %v1356 = vpop.permute.xlu0 %1355
    %v1358 = vmul.f32 %v1340, %v1356
    %v1359 = vpack.c.bf16 %v1358, %v1358
    %1361 = vrot.lane.b32.xlu0 %v1359, 96
    %v1362 = vpop.permute.xlu0 %1361
    %v1364 = vsel %vm1293, %v1362, 0
    %1366 = vmatprep.subr.bf16.mxu0 0
    %1367 = vmatpush1.bf16.msra.mxu0 %v1291
    %1368 = vmatprep.subr.bf16.mxu0 0
    %1369 = vmatpush1.bf16.msra.mxu0 0
    %1370 = vmatprep.subr.bf16.mxu0 0
    %1371 = vmatpush1.bf16.msra.mxu0 0
    %1372 = vmatprep.subr.bf16.mxu0 0
    %1373 = vmatpush1.bf16.msra.mxu0 0
    %1374 = vmatprep.subr.bf16.mxu0 0
    %1375 = vmatpush1.bf16.msra.mxu0 0
    %1376 = vmatprep.subr.bf16.mxu0 0
    %1377 = vmatpush1.bf16.msra.mxu0 0
    %1378 = vmatprep.subr.bf16.mxu0 0
    %1379 = vmatpush1.bf16.msra.mxu0 0
    %1380 = vmatprep.subr.bf16.mxu0 0
    %1381 = vmatpush1.bf16.msra.mxu0 0
    %1382 = vmatprep.subr.bf16.mxu0 0
    %1383 = vmatpush1.bf16.msra.mxu0 0
    %1384 = vmatprep.subr.bf16.mxu0 0
    %1385 = vmatpush1.bf16.msra.mxu0 0
    %1386 = vmatprep.subr.bf16.mxu0 0
    %1387 = vmatpush1.bf16.msra.mxu0 0
    %1388 = vmatprep.subr.bf16.mxu0 0
    %1389 = vmatpush1.bf16.msra.mxu0 0
    %1390 = vmatprep.subr.bf16.mxu0 0
    %1391 = vmatpush1.bf16.msra.mxu0 0
    %1392 = vmatprep.subr.bf16.mxu0 0
    %1393 = vmatpush1.bf16.msra.mxu0 0
    %1394 = vmatprep.subr.bf16.mxu0 0
    %1395 = vmatpush1.bf16.msra.mxu0 0
    %1396 = vmatprep.subr.bf16.mxu0 0
    %1397 = vmatpush1.bf16.msra.mxu0 0
    %1398 = vmatprep.mubr.bf16.mxu0 0
    %1399 = vmatmul.mubr.bf16.gmra.mrb[0].mxu0 %v1364
    %v1400 = vpop.f32.mrb[0].mxu0
    %v1401 = vadd.f32 0.0, %v1400
    %v1402 = vpop.f32.mrb[0].mxu0
    %v1403 = vpop.f32.mrb[0].mxu0
    %v1404 = vpop.f32.mrb[0].mxu0
    %1405 = vdwg.mxu0
    %v1406 = vadd.f32 %v1269, %v1401
    %v1407 = vmul.f32 %v1406, 0.5
    %v1408 = vtanh.pop %v1407
    %v1409 = vmul.f32 %v1408, 0.5
    %v1410 = vadd.f32 %v1409, 0.5
    %v1411 = vtanh.pop %v1406
    %v1412 = vmul.f32 %v1410, %v1352
    %1414 = vrot.lane.b32.xlu0 %v1411, 80
    %v1415 = vpop.permute.xlu0 %1414
    %v1417 = vmul.f32 %v1410, %v1415
    %1419 = vrot.lane.b32.xlu0 %v1417, 16
    %v1420 = vpop.permute.xlu0 %1419
    %v1422 = vadd.f32 %v1412, %v1420
    %v1423 = vtanh.pop %v1422
    %1425 = vrot.lane.b32.xlu0 %v1423, 16
    %v1426 = vpop.permute.xlu0 %1425
    %v1428 = vmul.f32 %v1410, %v1426
    %v1429 = vpack.c.bf16 %v1428, %v1428
    %1431 = vrot.lane.b32.xlu0 %v1429, 96
    %v1432 = vpop.permute.xlu0 %1431
    %v1434 = vsel %vm1293, %v1432, 0
    %1436 = vmatprep.subr.bf16.mxu0 0
    %1437 = vmatpush1.bf16.msra.mxu0 %v1291
    %1438 = vmatprep.subr.bf16.mxu0 0
    %1439 = vmatpush1.bf16.msra.mxu0 0
    %1440 = vmatprep.subr.bf16.mxu0 0
    %1441 = vmatpush1.bf16.msra.mxu0 0
    %1442 = vmatprep.subr.bf16.mxu0 0
    %1443 = vmatpush1.bf16.msra.mxu0 0
    %1444 = vmatprep.subr.bf16.mxu0 0
    %1445 = vmatpush1.bf16.msra.mxu0 0
    %1446 = vmatprep.subr.bf16.mxu0 0
    %1447 = vmatpush1.bf16.msra.mxu0 0
    %1448 = vmatprep.subr.bf16.mxu0 0
    %1449 = vmatpush1.bf16.msra.mxu0 0
    %1450 = vmatprep.subr.bf16.mxu0 0
    %1451 = vmatpush1.bf16.msra.mxu0 0
    %1452 = vmatprep.subr.bf16.mxu0 0
    %1453 = vmatpush1.bf16.msra.mxu0 0
    %1454 = vmatprep.subr.bf16.mxu0 0
    %1455 = vmatpush1.bf16.msra.mxu0 0
    %1456 = vmatprep.subr.bf16.mxu0 0
    %1457 = vmatpush1.bf16.msra.mxu0 0
    %1458 = vmatprep.subr.bf16.mxu0 0
    %1459 = vmatpush1.bf16.msra.mxu0 0
    %1460 = vmatprep.subr.bf16.mxu0 0
    %1461 = vmatpush1.bf16.msra.mxu0 0
    %1462 = vmatprep.subr.bf16.mxu0 0
    %1463 = vmatpush1.bf16.msra.mxu0 0
    %1464 = vmatprep.subr.bf16.mxu0 0
    %1465 = vmatpush1.bf16.msra.mxu0 0
    %1466 = vmatprep.subr.bf16.mxu0 0
    %1467 = vmatpush1.bf16.msra.mxu0 0
    %1468 = vmatprep.mubr.bf16.mxu0 0
    %1469 = vmatmul.mubr.bf16.gmra.mrb[0].mxu0 %v1434
    %v1470 = vpop.f32.mrb[0].mxu0
    %v1471 = vadd.f32 0.0, %v1470
    %v1472 = vpop.f32.mrb[0].mxu0
    %v1473 = vpop.f32.mrb[0].mxu0
    %v1474 = vpop.f32.mrb[0].mxu0
    %1475 = vdwg.mxu0
    %v1476 = vadd.f32 %v1274, %v1471
    %v1477 = vmul.f32 %v1476, 0.5
    %v1478 = vtanh.pop %v1477
    %v1479 = vmul.f32 %v1478, 0.5
    %v1480 = vadd.f32 %v1479, 0.5
    %v1481 = vtanh.pop %v1476
    %v1482 = vmul.f32 %v1480, %v1422
    %1484 = vrot.lane.b32.xlu0 %v1481, 80
    %v1485 = vpop.permute.xlu0 %1484
    %v1487 = vmul.f32 %v1480, %v1485
    %1489 = vrot.lane.b32.xlu0 %v1487, 16
    %v1490 = vpop.permute.xlu0 %1489
    %v1492 = vadd.f32 %v1482, %v1490
    %v1493 = vtanh.pop %v1492
    %1495 = vrot.lane.b32.xlu0 %v1493, 16
    %v1496 = vpop.permute.xlu0 %1495
    %v1498 = vmul.f32 %v1480, %v1496
    %v1499 = vpack.c.bf16 %v1498, %v1498
    %1501 = vrot.lane.b32.xlu0 %v1499, 96
    %v1502 = vpop.permute.xlu0 %1501
    %v1504 = vsel %vm1293, %v1502, 0
    %1506 = vmatprep.subr.bf16.mxu0 0
    %1507 = vmatpush1.bf16.msra.mxu0 %v1291
    %1508 = vmatprep.subr.bf16.mxu0 0
    %1509 = vmatpush1.bf16.msra.mxu0 0
    %1510 = vmatprep.subr.bf16.mxu0 0
    %1511 = vmatpush1.bf16.msra.mxu0 0
    %1512 = vmatprep.subr.bf16.mxu0 0
    %1513 = vmatpush1.bf16.msra.mxu0 0
    %1514 = vmatprep.subr.bf16.mxu0 0
    %1515 = vmatpush1.bf16.msra.mxu0 0
    %1516 = vmatprep.subr.bf16.mxu0 0
    %1517 = vmatpush1.bf16.msra.mxu0 0
    %1518 = vmatprep.subr.bf16.mxu0 0
    %1519 = vmatpush1.bf16.msra.mxu0 0
    %1520 = vmatprep.subr.bf16.mxu0 0
    %1521 = vmatpush1.bf16.msra.mxu0 0
    %1522 = vmatprep.subr.bf16.mxu0 0
    %1523 = vmatpush1.bf16.msra.mxu0 0
    %1524 = vmatprep.subr.bf16.mxu0 0
    %1525 = vmatpush1.bf16.msra.mxu0 0
    %1526 = vmatprep.subr.bf16.mxu0 0
    %1527 = vmatpush1.bf16.msra.mxu0 0
    %1528 = vmatprep.subr.bf16.mxu0 0
    %1529 = vmatpush1.bf16.msra.mxu0 0
    %1530 = vmatprep.subr.bf16.mxu0 0
    %1531 = vmatpush1.bf16.msra.mxu0 0
    %1532 = vmatprep.subr.bf16.mxu0 0
    %1533 = vmatpush1.bf16.msra.mxu0 0
    %1534 = vmatprep.subr.bf16.mxu0 0
    %1535 = vmatpush1.bf16.msra.mxu0 0
    %1536 = vmatprep.subr.bf16.mxu0 0
    %1537 = vmatpush1.bf16.msra.mxu0 0
    %1538 = vmatprep.mubr.bf16.mxu0 0
    %1539 = vmatmul.mubr.bf16.gmra.mrb[0].mxu0 %v1504
    %v1540 = vpop.f32.mrb[0].mxu0
    %v1541 = vadd.f32 0.0, %v1540
    %v1542 = vpop.f32.mrb[0].mxu0
    %v1543 = vpop.f32.mrb[0].mxu0
    %v1544 = vpop.f32.mrb[0].mxu0
    %1545 = vdwg.mxu0
    %v1546 = vadd.f32 %v1277, %v1541
    %v1547 = vmul.f32 %v1546, 0.5
    %v1548 = vtanh.pop %v1547
    %v1549 = vmul.f32 %v1548, 0.5
    %v1550 = vadd.f32 %v1549, 0.5
    %v1551 = vtanh.pop %v1546
    %v1552 = vmul.f32 %v1550, %v1492
    %1554 = vrot.lane.b32.xlu0 %v1551, 80
    %v1555 = vpop.permute.xlu0 %1554
    %v1557 = vmul.f32 %v1550, %v1555
    %1559 = vrot.lane.b32.xlu0 %v1557, 16
    %v1560 = vpop.permute.xlu0 %1559
    %v1562 = vadd.f32 %v1552, %v1560
    %v1563 = vtanh.pop %v1562
    %1565 = vrot.lane.b32.xlu0 %v1563, 16
    %v1566 = vpop.permute.xlu0 %1565
    %v1568 = vmul.f32 %v1550, %v1566
    %v1569 = vpack.c.bf16 %v1568, %v1568
    %1571 = vrot.lane.b32.xlu0 %v1569, 96
    %v1572 = vpop.permute.xlu0 %1571
    %v1574 = vsel %vm1293, %v1572, 0
    %1576 = vmatprep.subr.bf16.mxu0 0
    %1577 = vmatpush1.bf16.msra.mxu0 %v1291
    %1578 = vmatprep.subr.bf16.mxu0 0
    %1579 = vmatpush1.bf16.msra.mxu0 0
    %1580 = vmatprep.subr.bf16.mxu0 0
    %1581 = vmatpush1.bf16.msra.mxu0 0
    %1582 = vmatprep.subr.bf16.mxu0 0
    %1583 = vmatpush1.bf16.msra.mxu0 0
    %1584 = vmatprep.subr.bf16.mxu0 0
    %1585 = vmatpush1.bf16.msra.mxu0 0
    %1586 = vmatprep.subr.bf16.mxu0 0
    %1587 = vmatpush1.bf16.msra.mxu0 0
    %1588 = vmatprep.subr.bf16.mxu0 0
    %1589 = vmatpush1.bf16.msra.mxu0 0
    %1590 = vmatprep.subr.bf16.mxu0 0
    %1591 = vmatpush1.bf16.msra.mxu0 0
    %1592 = vmatprep.subr.bf16.mxu0 0
    %1593 = vmatpush1.bf16.msra.mxu0 0
    %1594 = vmatprep.subr.bf16.mxu0 0
    %1595 = vmatpush1.bf16.msra.mxu0 0
    %1596 = vmatprep.subr.bf16.mxu0 0
    %1597 = vmatpush1.bf16.msra.mxu0 0
    %1598 = vmatprep.subr.bf16.mxu0 0
    %1599 = vmatpush1.bf16.msra.mxu0 0
    %1600 = vmatprep.subr.bf16.mxu0 0
    %1601 = vmatpush1.bf16.msra.mxu0 0
    %1602 = vmatprep.subr.bf16.mxu0 0
    %1603 = vmatpush1.bf16.msra.mxu0 0
    %1604 = vmatprep.subr.bf16.mxu0 0
    %1605 = vmatpush1.bf16.msra.mxu0 0
    %1606 = vmatprep.subr.bf16.mxu0 0
    %1607 = vmatpush1.bf16.msra.mxu0 0
    %1608 = vmatprep.mubr.bf16.mxu0 0
    %1609 = vmatmul.mubr.bf16.gmra.mrb[0].mxu0 %v1574
    %v1610 = vpop.f32.mrb[0].mxu0
    %v1611 = vadd.f32 0.0, %v1610
    %v1612 = vpop.f32.mrb[0].mxu0
    %v1613 = vpop.f32.mrb[0].mxu0
    %v1614 = vpop.f32.mrb[0].mxu0
    %1615 = vdwg.mxu0
    %v1616 = vadd.f32 %v1282, %v1611
    %v1617 = vmul.f32 %v1616, 0.5
    %v1618 = vtanh.pop %v1617
    %v1619 = vmul.f32 %v1618, 0.5
    %v1620 = vadd.f32 %v1619, 0.5
    %v1621 = vtanh.pop %v1616
    %v1622 = vmul.f32 %v1620, %v1562
    %1624 = vrot.lane.b32.xlu0 %v1621, 80
    %v1625 = vpop.permute.xlu0 %1624
    %v1627 = vmul.f32 %v1620, %v1625
    %1629 = vrot.lane.b32.xlu0 %v1627, 16
    %v1630 = vpop.permute.xlu0 %1629
    %v1632 = vadd.f32 %v1622, %v1630
    %v1633 = vtanh.pop %v1632
    %1635 = vrot.lane.b32.xlu0 %v1633, 16
    %v1636 = vpop.permute.xlu0 %1635
    %v1638 = vmul.f32 %v1620, %v1636
    %v1639 = vld [vmem:[#allocation11] sm:$0xf]
    %v1640 = vld [vmem:[#allocation11 + $0x4] sm:$0xf]
    %v1641 = vld [vmem:[#allocation11 + $0x8] sm:$0xf]
    %v1642 = vld [vmem:[#allocation11 + $0xc] sm:$0xf]
    %v1643 = vld [vmem:[#allocation11 + $0x10] sm:$0xf]
    %v1644 = vld [vmem:[#allocation11 + $0x14] sm:$0xf]
    %v1645 = vld [vmem:[#allocation11 + $0x18] sm:$0xf]
    %v1646 = vld [vmem:[#allocation11 + $0x1c] sm:$0xf]
    %v1647 = vld [vmem:[#allocation11 + $0x20] sm:$0xf]
    %v1648 = vld [vmem:[#allocation11 + $0x24] sm:$0xf]
    %v1651 = vunpack.c.l.b16 %v1641
    %v1652 = vunpack.c.l.b16 %v1642
    %v1653 = vpack.c.b16 %v1652, %v1651
    %1655 = vmatprep.subr.bf16.mxu0 0
    %1656 = vmatpush1.bf16.msra.mxu0 %v1653
    %1657 = vmatprep.subr.bf16.mxu0 0
    %1658 = vmatpush1.bf16.msra.mxu0 0
    %1659 = vmatprep.subr.bf16.mxu0 0
    %1660 = vmatpush1.bf16.msra.mxu0 0
    %1661 = vmatprep.subr.bf16.mxu0 0
    %1662 = vmatpush1.bf16.msra.mxu0 0
    %1663 = vmatprep.subr.bf16.mxu0 0
    %1664 = vmatpush1.bf16.msra.mxu0 0
    %1665 = vmatprep.subr.bf16.mxu0 0
    %1666 = vmatpush1.bf16.msra.mxu0 0
    %1667 = vmatprep.subr.bf16.mxu0 0
    %1668 = vmatpush1.bf16.msra.mxu0 0
    %1669 = vmatprep.subr.bf16.mxu0 0
    %1670 = vmatpush1.bf16.msra.mxu0 0
    %1671 = vmatprep.subr.bf16.mxu0 0
    %1672 = vmatpush1.bf16.msra.mxu0 0
    %1673 = vmatprep.subr.bf16.mxu0 0
    %1674 = vmatpush1.bf16.msra.mxu0 0
    %1675 = vmatprep.subr.bf16.mxu0 0
    %1676 = vmatpush1.bf16.msra.mxu0 0
    %1677 = vmatprep.subr.bf16.mxu0 0
    %1678 = vmatpush1.bf16.msra.mxu0 0
    %1679 = vmatprep.subr.bf16.mxu0 0
    %1680 = vmatpush1.bf16.msra.mxu0 0
    %1681 = vmatprep.subr.bf16.mxu0 0
    %1682 = vmatpush1.bf16.msra.mxu0 0
    %1683 = vmatprep.subr.bf16.mxu0 0
    %1684 = vmatpush1.bf16.msra.mxu0 0
    %1685 = vmatprep.subr.bf16.mxu0 0
    %1686 = vmatpush1.bf16.msra.mxu0 0
    %1687 = vmatprep.mubr.bf16.mxu0 0
    %1688 = vmatmul.mubr.bf16.gmra.mrb[0].mxu0 %v1434
    %v1689 = vpop.f32.mrb[0].mxu0
    %v1690 = vadd.f32 0.0, %v1689
    %v1691 = vpop.f32.mrb[0].mxu0
    %v1692 = vpop.f32.mrb[0].mxu0
    %v1693 = vpop.f32.mrb[0].mxu0
    %1694 = vdwg.mxu0
    %v1697 = vunpack.c.l.b16 %v1645
    %v1698 = vunpack.c.l.b16 %v1646
    %v1699 = vpack.c.b16 %v1698, %v1697
    %1701 = vmatprep.subr.bf16.mxu0 0
    %1702 = vmatpush1.bf16.msra.mxu0 %v1699
    %1703 = vmatprep.subr.bf16.mxu0 0
    %1704 = vmatpush1.bf16.msra.mxu0 0
    %1705 = vmatprep.subr.bf16.mxu0 0
    %1706 = vmatpush1.bf16.msra.mxu0 0
    %1707 = vmatprep.subr.bf16.mxu0 0
    %1708 = vmatpush1.bf16.msra.mxu0 0
    %1709 = vmatprep.subr.bf16.mxu0 0
    %1710 = vmatpush1.bf16.msra.mxu0 0
    %1711 = vmatprep.subr.bf16.mxu0 0
    %1712 = vmatpush1.bf16.msra.mxu0 0
    %1713 = vmatprep.subr.bf16.mxu0 0
    %1714 = vmatpush1.bf16.msra.mxu0 0
    %1715 = vmatprep.subr.bf16.mxu0 0
    %1716 = vmatpush1.bf16.msra.mxu0 0
    %1717 = vmatprep.subr.bf16.mxu0 0
    %1718 = vmatpush1.bf16.msra.mxu0 0
    %1719 = vmatprep.subr.bf16.mxu0 0
    %1720 = vmatpush1.bf16.msra.mxu0 0
    %1721 = vmatprep.subr.bf16.mxu0 0
    %1722 = vmatpush1.bf16.msra.mxu0 0
    %1723 = vmatprep.subr.bf16.mxu0 0
    %1724 = vmatpush1.bf16.msra.mxu0 0
    %1725 = vmatprep.subr.bf16.mxu0 0
    %1726 = vmatpush1.bf16.msra.mxu0 0
    %1727 = vmatprep.subr.bf16.mxu0 0
    %1728 = vmatpush1.bf16.msra.mxu0 0
    %1729 = vmatprep.subr.bf16.mxu0 0
    %1730 = vmatpush1.bf16.msra.mxu0 0
    %1731 = vmatprep.subr.bf16.mxu0 0
    %1732 = vmatpush1.bf16.msra.mxu0 0
    %1733 = vmatprep.mubr.bf16.mxu0 0
    %1734 = vmatmul.mubr.bf16.gmra.mrb[0].mxu0 %v1574
    %v1735 = vpop.f32.mrb[0].mxu0
    %v1736 = vadd.f32 0.0, %v1735
    %v1737 = vpop.f32.mrb[0].mxu0
    %v1738 = vpop.f32.mrb[0].mxu0
    %v1739 = vpop.f32.mrb[0].mxu0
    %1740 = vdwg.mxu0
    %v1741 = vpack.c.bf16 %v1638, %v1638
    %1743 = vrot.lane.b32.xlu0 %v1741, 96
    %v1744 = vpop.permute.xlu0 %1743
    %v1747 = vunpack.c.l.b16 %v1647
    %v1748 = vunpack.c.l.b16 %v1648
    %v1749 = vpack.c.b16 %v1748, %v1747
    %v1752 = vsel %vm1293, %v1744, 0
    %1754 = vmatprep.subr.bf16.mxu0 0
    %1755 = vmatpush1.bf16.msra.mxu0 %v1749
    %1756 = vmatprep.subr.bf16.mxu0 0
    %1757 = vmatpush1.bf16.msra.mxu0 0
    %1758 = vmatprep.subr.bf16.mxu0 0
    %1759 = vmatpush1.bf16.msra.mxu0 0
    %1760 = vmatprep.subr.bf16.mxu0 0
    %1761 = vmatpush1.bf16.msra.mxu0 0
    %1762 = vmatprep.subr.bf16.mxu0 0
    %1763 = vmatpush1.bf16.msra.mxu0 0
    %1764 = vmatprep.subr.bf16.mxu0 0
    %1765 = vmatpush1.bf16.msra.mxu0 0
    %1766 = vmatprep.subr.bf16.mxu0 0
    %1767 = vmatpush1.bf16.msra.mxu0 0
    %1768 = vmatprep.subr.bf16.mxu0 0
    %1769 = vmatpush1.bf16.msra.mxu0 0
    %1770 = vmatprep.subr.bf16.mxu0 0
    %1771 = vmatpush1.bf16.msra.mxu0 0
    %1772 = vmatprep.subr.bf16.mxu0 0
    %1773 = vmatpush1.bf16.msra.mxu0 0
    %1774 = vmatprep.subr.bf16.mxu0 0
    %1775 = vmatpush1.bf16.msra.mxu0 0
    %1776 = vmatprep.subr.bf16.mxu0 0
    %1777 = vmatpush1.bf16.msra.mxu0 0
    %1778 = vmatprep.subr.bf16.mxu0 0
    %1779 = vmatpush1.bf16.msra.mxu0 0
    %1780 = vmatprep.subr.bf16.mxu0 0
    %1781 = vmatpush1.bf16.msra.mxu0 0
    %1782 = vmatprep.subr.bf16.mxu0 0
    %1783 = vmatpush1.bf16.msra.mxu0 0
    %1784 = vmatprep.subr.bf16.mxu0 0
    %1785 = vmatpush1.bf16.msra.mxu0 0
    %1786 = vmatprep.mubr.bf16.mxu0 0
    %1787 = vmatmul.mubr.bf16.gmra.mrb[0].mxu0 %v1752
    %v1788 = vpop.f32.mrb[0].mxu0
    %v1789 = vadd.f32 0.0, %v1788
    %v1790 = vpop.f32.mrb[0].mxu0
    %v1791 = vpop.f32.mrb[0].mxu0
    %v1792 = vpop.f32.mrb[0].mxu0
    %1793 = vdwg.mxu0
    %v1796 = vunpack.c.l.b16 %v1639
    %v1797 = vunpack.c.l.b16 %v1640
    %v1798 = vpack.c.b16 %v1797, %v1796
    %1800 = vmatprep.subr.bf16.mxu0 0
    %1801 = vmatpush1.bf16.msra.mxu0 %v1798
    %1802 = vmatprep.subr.bf16.mxu0 0
    %1803 = vmatpush1.bf16.msra.mxu0 0
    %1804 = vmatprep.subr.bf16.mxu0 0
    %1805 = vmatpush1.bf16.msra.mxu0 0
    %1806 = vmatprep.subr.bf16.mxu0 0
    %1807 = vmatpush1.bf16.msra.mxu0 0
    %1808 = vmatprep.subr.bf16.mxu0 0
    %1809 = vmatpush1.bf16.msra.mxu0 0
    %1810 = vmatprep.subr.bf16.mxu0 0
    %1811 = vmatpush1.bf16.msra.mxu0 0
    %1812 = vmatprep.subr.bf16.mxu0 0
    %1813 = vmatpush1.bf16.msra.mxu0 0
    %1814 = vmatprep.subr.bf16.mxu0 0
    %1815 = vmatpush1.bf16.msra.mxu0 0
    %1816 = vmatprep.subr.bf16.mxu0 0
    %1817 = vmatpush1.bf16.msra.mxu0 0
    %1818 = vmatprep.subr.bf16.mxu0 0
    %1819 = vmatpush1.bf16.msra.mxu0 0
    %1820 = vmatprep.subr.bf16.mxu0 0
    %1821 = vmatpush1.bf16.msra.mxu0 0
    %1822 = vmatprep.subr.bf16.mxu0 0
    %1823 = vmatpush1.bf16.msra.mxu0 0
    %1824 = vmatprep.subr.bf16.mxu0 0
    %1825 = vmatpush1.bf16.msra.mxu0 0
    %1826 = vmatprep.subr.bf16.mxu0 0
    %1827 = vmatpush1.bf16.msra.mxu0 0
    %1828 = vmatprep.subr.bf16.mxu0 0
    %1829 = vmatpush1.bf16.msra.mxu0 0
    %1830 = vmatprep.subr.bf16.mxu0 0
    %1831 = vmatpush1.bf16.msra.mxu0 0
    %1832 = vmatprep.mubr.bf16.mxu0 0
    %1833 = vmatmul.mubr.bf16.gmra.mrb[0].mxu0 %v1364
    %v1834 = vpop.f32.mrb[0].mxu0
    %v1835 = vadd.f32 %v1690, %v1834
    %v1836 = vpop.f32.mrb[0].mxu0
    %v1837 = vpop.f32.mrb[0].mxu0
    %v1838 = vpop.f32.mrb[0].mxu0
    %1839 = vdwg.mxu0
    %v1842 = vunpack.c.l.b16 %v1643
    %v1843 = vunpack.c.l.b16 %v1644
    %v1844 = vpack.c.b16 %v1843, %v1842
    %1846 = vmatprep.subr.bf16.mxu0 0
    %1847 = vmatpush1.bf16.msra.mxu0 %v1844
    %1848 = vmatprep.subr.bf16.mxu0 0
    %1849 = vmatpush1.bf16.msra.mxu0 0
    %1850 = vmatprep.subr.bf16.mxu0 0
    %1851 = vmatpush1.bf16.msra.mxu0 0
    %1852 = vmatprep.subr.bf16.mxu0 0
    %1853 = vmatpush1.bf16.msra.mxu0 0
    %1854 = vmatprep.subr.bf16.mxu0 0
    %1855 = vmatpush1.bf16.msra.mxu0 0
    %1856 = vmatprep.subr.bf16.mxu0 0
    %1857 = vmatpush1.bf16.msra.mxu0 0
    %1858 = vmatprep.subr.bf16.mxu0 0
    %1859 = vmatpush1.bf16.msra.mxu0 0
    %1860 = vmatprep.subr.bf16.mxu0 0
    %1861 = vmatpush1.bf16.msra.mxu0 0
    %1862 = vmatprep.subr.bf16.mxu0 0
    %1863 = vmatpush1.bf16.msra.mxu0 0
    %1864 = vmatprep.subr.bf16.mxu0 0
    %1865 = vmatpush1.bf16.msra.mxu0 0
    %1866 = vmatprep.subr.bf16.mxu0 0
    %1867 = vmatpush1.bf16.msra.mxu0 0
    %1868 = vmatprep.subr.bf16.mxu0 0
    %1869 = vmatpush1.bf16.msra.mxu0 0
    %1870 = vmatprep.subr.bf16.mxu0 0
    %1871 = vmatpush1.bf16.msra.mxu0 0
    %1872 = vmatprep.subr.bf16.mxu0 0
    %1873 = vmatpush1.bf16.msra.mxu0 0
    %1874 = vmatprep.subr.bf16.mxu0 0
    %1875 = vmatpush1.bf16.msra.mxu0 0
    %1876 = vmatprep.subr.bf16.mxu0 0
    %1877 = vmatpush1.bf16.msra.mxu0 0
    %1878 = vmatprep.mubr.bf16.mxu0 0
    %1879 = vmatmul.mubr.bf16.gmra.mrb[0].mxu0 %v1504
    %v1880 = vpop.f32.mrb[0].mxu0
    %v1881 = vadd.f32 %v1736, %v1880
    %v1882 = vpop.f32.mrb[0].mxu0
    %v1883 = vpop.f32.mrb[0].mxu0
    %v1884 = vpop.f32.mrb[0].mxu0
    %1885 = vdwg.mxu0
    %v1886 = vadd.f32 %v1835, %v1881
    %v1887 = vadd.f32 %v1886, %v1789
    %v1888 = vld [vmem:[#allocation12] sm:$0x1]
    %v1890 = vlaneseq
    %v1891 = vshrl.u32 %v1890, 7
    %v1892 = vsub.s32 0, %v1891
    %v1893 = vrot.slane %v1888, %v1892
    %v1895 = vadd.f32 %v1887, %v1893
    %v1896 = vmax.f32 %v1895, 0.0
    %v1897 = vpack.c.bf16 %v1896, %v1896
    %v1898 = vld [vmem:[#allocation14] sm:$0xf]
    %v1899 = vld [vmem:[#allocation14 + $0x4] sm:$0xf]
    %v1900 = vld [vmem:[#allocation14 + $0x8] sm:$0xf]
    %v1901 = vld [vmem:[#allocation14 + $0xc] sm:$0xf]
    %v1902 = vld [vmem:[#allocation14 + $0x10] sm:$0xf]
    %v1903 = vld [vmem:[#allocation14 + $0x14] sm:$0xf]
    %v1904 = vld [vmem:[#allocation14 + $0x18] sm:$0xf]
    %v1905 = vld [vmem:[#allocation14 + $0x1c] sm:$0xf]
    %v1906 = vld [vmem:[#allocation14 + $0x20] sm:$0xf]
    %v1907 = vld [vmem:[#allocation14 + $0x24] sm:$0xf]
    %v1908 = vld [vmem:[#allocation14 + $0x28] sm:$0xf]
    %v1909 = vld [vmem:[#allocation14 + $0x2c] sm:$0xf]
    %v1910 = vld [vmem:[#allocation14 + $0x30] sm:$0xf]
    %v1911 = vld [vmem:[#allocation14 + $0x34] sm:$0xf]
    %v1912 = vld [vmem:[#allocation14 + $0x38] sm:$0xf]
    %v1913 = vld [vmem:[#allocation14 + $0x3c] sm:$0xf]
    %v1914 = vld [vmem:[#allocation15] sm:$0x1]
    %v1916 = vlaneseq
    %v1917 = vshrl.u32 %v1916, 7
    %v1918 = vsub.s32 0, %v1917
    %v1919 = vrot.slane %v1914, %v1918
    %v1937 = vunpack.c.l.b16 %v1898
    %v1938 = vunpack.c.l.b16 %v1899
    %v1939 = vunpack.c.l.b16 %v1900
    %v1940 = vunpack.c.l.b16 %v1901
    %v1941 = vunpack.c.l.b16 %v1902
    %v1942 = vunpack.c.l.b16 %v1903
    %v1943 = vunpack.c.l.b16 %v1904
    %v1944 = vunpack.c.l.b16 %v1905
    %v1945 = vunpack.c.l.b16 %v1906
    %v1946 = vunpack.c.l.b16 %v1907
    %v1947 = vunpack.c.l.b16 %v1908
    %v1948 = vunpack.c.l.b16 %v1909
    %v1949 = vunpack.c.l.b16 %v1910
    %v1950 = vunpack.c.l.b16 %v1911
    %v1951 = vunpack.c.l.b16 %v1912
    %v1952 = vunpack.c.l.b16 %v1913
    %v1953 = vpack.c.b16 %v1938, %v1937
    %v1954 = vpack.c.b16 %v1940, %v1939
    %v1955 = vpack.c.b16 %v1942, %v1941
    %v1956 = vpack.c.b16 %v1944, %v1943
    %v1957 = vpack.c.b16 %v1946, %v1945
    %v1958 = vpack.c.b16 %v1948, %v1947
    %v1959 = vpack.c.b16 %v1950, %v1949
    %v1960 = vpack.c.b16 %v1952, %v1951
    %1969 = vmatprep.subr.bf16.mxu0 0
    %1970 = vmatpush1.bf16.msra.mxu0 %v1953
    %1971 = vmatprep.subr.bf16.mxu0 0
    %1972 = vmatpush1.bf16.msra.mxu0 %v1954
    %1973 = vmatprep.subr.bf16.mxu0 0
    %1974 = vmatpush1.bf16.msra.mxu0 %v1955
    %1975 = vmatprep.subr.bf16.mxu0 0
    %1976 = vmatpush1.bf16.msra.mxu0 %v1956
    %1977 = vmatprep.subr.bf16.mxu0 0
    %1978 = vmatpush1.bf16.msra.mxu0 %v1957
    %1979 = vmatprep.subr.bf16.mxu0 0
    %1980 = vmatpush1.bf16.msra.mxu0 %v1958
    %1981 = vmatprep.subr.bf16.mxu0 0
    %1982 = vmatpush1.bf16.msra.mxu0 %v1959
    %1983 = vmatprep.subr.bf16.mxu0 0
    %1984 = vmatpush1.bf16.msra.mxu0 %v1960
    %1985 = vmatprep.subr.bf16.mxu0 0
    %1986 = vmatpush1.bf16.msra.mxu0 0
    %1987 = vmatprep.subr.bf16.mxu0 0
    %1988 = vmatpush1.bf16.msra.mxu0 0
    %1989 = vmatprep.subr.bf16.mxu0 0
    %1990 = vmatpush1.bf16.msra.mxu0 0
    %1991 = vmatprep.subr.bf16.mxu0 0
    %1992 = vmatpush1.bf16.msra.mxu0 0
    %1993 = vmatprep.subr.bf16.mxu0 0
    %1994 = vmatpush1.bf16.msra.mxu0 0
    %1995 = vmatprep.subr.bf16.mxu0 0
    %1996 = vmatpush1.bf16.msra.mxu0 0
    %1997 = vmatprep.subr.bf16.mxu0 0
    %1998 = vmatpush1.bf16.msra.mxu0 0
    %1999 = vmatprep.subr.bf16.mxu0 0
    %2000 = vmatpush1.bf16.msra.mxu0 0
    %2001 = vmatprep.mubr.bf16.mxu0 0
    %2002 = vmatmul.mubr.bf16.gmra.mrb[0].mxu0 %v1897
    %v2003 = vpop.f32.mrb[0].mxu0
    %v2004 = vadd.f32 %v1919, %v2003
    %v2005 = vpop.f32.mrb[0].mxu0
    %v2006 = vpop.f32.mrb[0].mxu0
    %v2007 = vpop.f32.mrb[0].mxu0
    %2008 = vdwg.mxu0
    %2009 = vst [vmem:[%s14] sm:$0xff] %v2004
    // Predicated region
    $region90: #{lstm_model_forward.1} parent=1 // pred_check
      _
    $region91: #{lstm_model_forward.1} parent=1 // pred_check_branch
      %2011 = sbr.rel (0) target = $region93
    $region92: #{lstm_model_forward.1} parent=1 // pred_region
      _
    $region93: #{lstm_model_forward.1} parent=1 // pred_fallthru
      _
    // Predicated region
    $region94: #{lstm_model_forward.1} parent=1 // pred_check
      _
    $region95: #{lstm_model_forward.1} parent=1 // pred_check_branch
      %2013 = sbr.rel (0) target = $region97
    $region96: #{lstm_model_forward.1} parent=1 // pred_region
      _
    $region97: #{lstm_model_forward.1} parent=1 // pred_fallthru
      _
    %2014 = vsyncpa [#allocation5], 1
    %2015 = vsyncpa [#allocation7], 1
    %2016 = vsyncpa [#allocation10], 1
    %2017 = vsyncpa [#allocation13], 1
    %2018 = vsyncpa [#allocation16], 1

</llo_original>
